<compile_context>
chip_gen: v6e
topology: v6e:2x2x1
jax: 0.10.0
libtpu: 0.0.40
codegen_flags: <defaults>
</compile_context>

<pallas_src>
import jax
import jax.numpy as jnp
from jax.experimental import pallas as pl
from jax.experimental.pallas import tpu as pltpu

# Module hyper-parameters (match the PyTorch source, with a small sequence/batch).
INPUT_SIZE = 28
HIDDEN_SIZE = 128
NUM_CLASSES = 10
NUM_LAYERS = 2          # hard-coded as two explicit layers in the kernel
SEQ_LEN = 8
BATCH = 2

LANE = 128
SUBLANE = 8


def _round_up(x, m):
    return ((x + m - 1) // m) * m


def rnn_kernel(x_ref, wih0_ref, b0_ref, whh0_ref, wih1_ref, whh1_ref,
               b1_ref, wfc_ref, bfc_ref, out_ref):
    """Single invocation, wavefront-scheduled 2-layer tanh RNN + FC head.

    x_ref    : (T*B_pad, Din_pad)  time-major, feature-padded input, flattened
    wih0_ref : (Din_pad, H)        layer-0 input weight (pre-transposed, K-padded)
    b0_ref   : (1, H)              b_ih0 + b_hh0 (folded into the prologue)
    whh0_ref : (H, H)              layer-0 recurrent weight (pre-transposed)
    wih1_ref : (H, H)              layer-1 input weight (pre-transposed)
    whh1_ref : (H, H)              layer-1 recurrent weight (pre-transposed)
    b1_ref   : (B_pad, H)          b_ih1 + b_hh1, pre-broadcast
    wfc_ref  : (H, C_pad)          FC weight, classes zero-padded to 128 lanes
    bfc_ref  : (B_pad, C_pad)      FC bias, pre-broadcast / lane-padded
    out_ref  : (B_pad, C_pad)      lane-dense logits (sliced in the wrapper)
    """
    B, H = b1_ref.shape
    T = x_ref.shape[0] // B

    # ---- Prologue: hoisted layer-0 input projection for ALL timesteps -------
    # One (T*B, Din_pad) @ (Din_pad, H) MXU contraction; bias b0 folded in once.
    xproj = (
        jnp.dot(x_ref[...], wih0_ref[...], preferred_element_type=jnp.float32)
        + b0_ref[...]
    )
    b1 = b1_ref[...]          # loaded once; already broadcast to (B, H)

    # t = 0: initial hidden states are zero, so L0(0) = tanh(xproj[0]).
    h0 = jnp.tanh(xproj[0:B])                    # = L0(t=0)
    h1 = jnp.zeros((B, H), jnp.float32)          # = L1 state before t=0

    # ---- Layer-skewed wavefront -------------------------------------------
    # At iteration t (1..T-1), L0(t) and L1(t-1) are independent given
    # (h0 = L0(t-1), h1 = L1(t-2)): compute both, so the serial matmul->tanh
    # chain is T+1 stages instead of 2T.  T is small & static -> full unroll.
    for t in range(1, T):
        new_h0 = jnp.tanh(
            xproj[t * B:(t + 1) * B]
            + jnp.dot(h0, whh0_ref[...], preferred_element_type=jnp.float32)
        )
        new_h1 = jnp.tanh(
            jnp.dot(h0, wih1_ref[...], preferred_element_type=jnp.float32)
            + jnp.dot(h1, whh1_ref[...], preferred_element_type=jnp.float32)
            + b1
        )
        h0, h1 = new_h0, new_h1

    # ---- Epilogue: final layer-1 step L1(T-1), then lane-dense FC -----------
    h1 = jnp.tanh(
        jnp.dot(h0, wih1_ref[...], preferred_element_type=jnp.float32)
        + jnp.dot(h1, whh1_ref[...], preferred_element_type=jnp.float32)
        + b1
    )
    out_ref[...] = (
        jnp.dot(h1, wfc_ref[...], preferred_element_type=jnp.float32)
        + bfc_ref[...]
    ).astype(out_ref.dtype)


@jax.jit
def rnn_forward(x, params):
    """x: (B, T, D_in) batch-first float32. Returns logits (B, NUM_CLASSES)."""
    B, T, Din = x.shape
    H = params["whh0T"].shape[0]
    C = params["wfcT"].shape[1]

    din_pad = _round_up(Din, LANE)     # 28  -> 128
    b_pad = _round_up(B, SUBLANE)      # 2   -> 8   (full (8,128) output tile)
    c_pad = _round_up(C, LANE)         # 10  -> 128 (lane-dense FC store)

    # Time-major, zero-padded, flattened input: (T*B_pad, Din_pad).  Padded
    # batch rows / feature lanes are zero and never mix into real outputs.
    x_tm = jnp.transpose(x, (1, 0, 2))
    x_tm = jnp.pad(x_tm, ((0, 0), (0, b_pad - B), (0, din_pad - Din)))
    x2d = x_tm.reshape(T * b_pad, din_pad)

    # Weight / bias prep (fused & constant-foldable under jit).
    wih0 = jnp.pad(params["wih0T"], ((0, din_pad - Din), (0, 0)))   # (Din_pad, H)
    b0 = params["bih0"] + params["bhh0"]                            # (1, H)
    b1 = jnp.broadcast_to(params["bih1"] + params["bhh1"], (b_pad, H))
    wfc = jnp.pad(params["wfcT"], ((0, 0), (0, c_pad - C)))         # (H, C_pad)
    bfc = jnp.broadcast_to(
        jnp.pad(params["bfc"], ((0, 0), (0, c_pad - C))), (b_pad, c_pad))

    vmem = pl.BlockSpec(memory_space=pltpu.MemorySpace.VMEM)
    out_padded = pl.pallas_call(
        rnn_kernel,
        out_shape=jax.ShapeDtypeStruct((b_pad, c_pad), jnp.float32),
        in_specs=[vmem] * 9,
        out_specs=vmem,
    )(x2d, wih0, b0, params["whh0T"], params["wih1T"], params["whh1T"],
      b1, wfc, bfc)

    return out_padded[:B, :C]


def init_params(key):
    """Deterministic init, matching PyTorch shapes (stored transposed for the kernel)."""
    ks = jax.random.split(key, 10)
    stdv = 1.0 / jnp.sqrt(HIDDEN_SIZE)
    u = lambda k, shape: jax.random.uniform(k, shape, jnp.float32, -stdv, stdv)
    return {
        # layer 0: W_ih (H, Din) stored as (Din, H); W_hh (H, H) stored transposed
        "wih0T": u(ks[0], (INPUT_SIZE, HIDDEN_SIZE)),
        "whh0T": u(ks[1], (HIDDEN_SIZE, HIDDEN_SIZE)),
        "bih0": u(ks[2], (1, HIDDEN_SIZE)),
        "bhh0": u(ks[3], (1, HIDDEN_SIZE)),
        # layer 1
        "wih1T": u(ks[4], (HIDDEN_SIZE, HIDDEN_SIZE)),
        "whh1T": u(ks[5], (HIDDEN_SIZE, HIDDEN_SIZE)),
        "bih1": u(ks[6], (1, HIDDEN_SIZE)),
        "bhh1": u(ks[7], (1, HIDDEN_SIZE)),
        # fc: weight (C, H) stored as (H, C)
        "wfcT": u(ks[8], (HIDDEN_SIZE, NUM_CLASSES)),
        "bfc": u(ks[9], (1, NUM_CLASSES)),
    }


def rnn_forward_ref(x, p):
    """Pure-JAX reference (unfused, unpadded) for correctness checking."""
    B = x.shape[0]
    h0 = jnp.zeros((B, HIDDEN_SIZE), jnp.float32)
    h1 = jnp.zeros((B, HIDDEN_SIZE), jnp.float32)
    for t in range(x.shape[1]):
        xt = x[:, t, :]
        h0 = jnp.tanh(xt @ p["wih0T"] + p["bih0"] + h0 @ p["whh0T"] + p["bhh0"])
        h1 = jnp.tanh(h0 @ p["wih1T"] + p["bih1"] + h1 @ p["whh1T"] + p["bhh1"])
    return h1 @ p["wfcT"] + p["bfc"]


if __name__ == "__main__":
    key = jax.random.PRNGKey(0)
    k_x, k_p = jax.random.split(key)
    x = jax.random.normal(k_x, (BATCH, SEQ_LEN, INPUT_SIZE), jnp.float32)
    params = init_params(k_p)

    out = jax.block_until_ready(rnn_forward(x, params))

    ref = rnn_forward_ref(x, params)
    assert out.shape == (BATCH, NUM_CLASSES)
    assert jnp.allclose(out, ref, atol=1e-4, rtol=1e-4), "mismatch vs reference"

    print("KERNEL_OK")
</pallas_src>

<mosaic_0001>
module attributes {stable_mosaic.version = 11 : i64} {
  func.func @rnn_kernel(%arg0: memref<64x128xf32, #tpu.memory_space<vmem>>, %arg1: memref<128x128xf32, #tpu.memory_space<vmem>>, %arg2: memref<1x128xf32, #tpu.memory_space<vmem>>, %arg3: memref<128x128xf32, #tpu.memory_space<vmem>>, %arg4: memref<128x128xf32, #tpu.memory_space<vmem>>, %arg5: memref<128x128xf32, #tpu.memory_space<vmem>>, %arg6: memref<8x128xf32, #tpu.memory_space<vmem>>, %arg7: memref<128x128xf32, #tpu.memory_space<vmem>>, %arg8: memref<8x128xf32, #tpu.memory_space<vmem>>, %arg9: memref<8x128xf32, #tpu.memory_space<vmem>>) attributes {dimension_semantics = [], scalar_prefetch = 0 : i64, scratch_operands = 0 : i64, tpu.core_type = #tpu.core_type<tc>} {
    %c0 = arith.constant 0 : index
    %c0_0 = arith.constant 0 : index
    %0 = vector.load %arg0[%c0, %c0_0] : memref<64x128xf32, #tpu.memory_space<vmem>>, vector<64x128xf32>
    %c0_1 = arith.constant 0 : index
    %c0_2 = arith.constant 0 : index
    %1 = vector.load %arg1[%c0_1, %c0_2] : memref<128x128xf32, #tpu.memory_space<vmem>>, vector<128x128xf32>
    %cst = arith.constant dense<0.000000e+00> : vector<64x128xf32>
    %2 = tpu.matmul %0, %1, %cst {dimension_numbers = #tpu.dot_dimension_numbers<[1], [0], [0], [1], [0, 0, 1, 1], [], []>} : vector<64x128xf32>, vector<128x128xf32>, vector<64x128xf32> -> vector<64x128xf32>
    %c0_3 = arith.constant 0 : index
    %c0_4 = arith.constant 0 : index
    %3 = vector.load %arg2[%c0_3, %c0_4] : memref<1x128xf32, #tpu.memory_space<vmem>>, vector<1x128xf32>
    %4 = vector.broadcast %3 : vector<1x128xf32> to vector<64x128xf32>
    %5 = arith.addf %2, %4 : vector<64x128xf32>
    %c0_5 = arith.constant 0 : index
    %c0_6 = arith.constant 0 : index
    %6 = vector.load %arg6[%c0_5, %c0_6] : memref<8x128xf32, #tpu.memory_space<vmem>>, vector<8x128xf32>
    %7 = vector.extract_strided_slice %5 {offsets = [0, 0], sizes = [8, 128], strides = [1, 1]} : vector<64x128xf32> to vector<8x128xf32>
    %8 = math.tanh %7 : vector<8x128xf32>
    %cst_7 = arith.constant 0.000000e+00 : f32
    %9 = vector.broadcast %cst_7 : f32 to vector<8x128xf32>
    %10 = vector.extract_strided_slice %5 {offsets = [8, 0], sizes = [8, 128], strides = [1, 1]} : vector<64x128xf32> to vector<8x128xf32>
    %c0_8 = arith.constant 0 : index
    %c0_9 = arith.constant 0 : index
    %11 = vector.load %arg3[%c0_8, %c0_9] : memref<128x128xf32, #tpu.memory_space<vmem>>, vector<128x128xf32>
    %cst_10 = arith.constant dense<0.000000e+00> : vector<8x128xf32>
    %12 = tpu.matmul %8, %11, %cst_10 {dimension_numbers = #tpu.dot_dimension_numbers<[1], [0], [0], [1], [0, 0, 1, 1], [], []>} : vector<8x128xf32>, vector<128x128xf32>, vector<8x128xf32> -> vector<8x128xf32>
    %13 = arith.addf %10, %12 : vector<8x128xf32>
    %14 = math.tanh %13 : vector<8x128xf32>
    %c0_11 = arith.constant 0 : index
    %c0_12 = arith.constant 0 : index
    %15 = vector.load %arg4[%c0_11, %c0_12] : memref<128x128xf32, #tpu.memory_space<vmem>>, vector<128x128xf32>
    %cst_13 = arith.constant dense<0.000000e+00> : vector<8x128xf32>
    %16 = tpu.matmul %8, %15, %cst_13 {dimension_numbers = #tpu.dot_dimension_numbers<[1], [0], [0], [1], [0, 0, 1, 1], [], []>} : vector<8x128xf32>, vector<128x128xf32>, vector<8x128xf32> -> vector<8x128xf32>
    %c0_14 = arith.constant 0 : index
    %c0_15 = arith.constant 0 : index
    %17 = vector.load %arg5[%c0_14, %c0_15] : memref<128x128xf32, #tpu.memory_space<vmem>>, vector<128x128xf32>
    %cst_16 = arith.constant dense<0.000000e+00> : vector<8x128xf32>
    %18 = tpu.matmul %9, %17, %cst_16 {dimension_numbers = #tpu.dot_dimension_numbers<[1], [0], [0], [1], [0, 0, 1, 1], [], []>} : vector<8x128xf32>, vector<128x128xf32>, vector<8x128xf32> -> vector<8x128xf32>
    %19 = arith.addf %16, %18 : vector<8x128xf32>
    %20 = arith.addf %19, %6 : vector<8x128xf32>
    %21 = math.tanh %20 : vector<8x128xf32>
    %22 = vector.extract_strided_slice %5 {offsets = [16, 0], sizes = [8, 128], strides = [1, 1]} : vector<64x128xf32> to vector<8x128xf32>
    %c0_17 = arith.constant 0 : index
    %c0_18 = arith.constant 0 : index
    %23 = vector.load %arg3[%c0_17, %c0_18] : memref<128x128xf32, #tpu.memory_space<vmem>>, vector<128x128xf32>
    %cst_19 = arith.constant dense<0.000000e+00> : vector<8x128xf32>
    %24 = tpu.matmul %14, %23, %cst_19 {dimension_numbers = #tpu.dot_dimension_numbers<[1], [0], [0], [1], [0, 0, 1, 1], [], []>} : vector<8x128xf32>, vector<128x128xf32>, vector<8x128xf32> -> vector<8x128xf32>
    %25 = arith.addf %22, %24 : vector<8x128xf32>
    %26 = math.tanh %25 : vector<8x128xf32>
    %c0_20 = arith.constant 0 : index
    %c0_21 = arith.constant 0 : index
    %27 = vector.load %arg4[%c0_20, %c0_21] : memref<128x128xf32, #tpu.memory_space<vmem>>, vector<128x128xf32>
    %cst_22 = arith.constant dense<0.000000e+00> : vector<8x128xf32>
    %28 = tpu.matmul %14, %27, %cst_22 {dimension_numbers = #tpu.dot_dimension_numbers<[1], [0], [0], [1], [0, 0, 1, 1], [], []>} : vector<8x128xf32>, vector<128x128xf32>, vector<8x128xf32> -> vector<8x128xf32>
    %c0_23 = arith.constant 0 : index
    %c0_24 = arith.constant 0 : index
    %29 = vector.load %arg5[%c0_23, %c0_24] : memref<128x128xf32, #tpu.memory_space<vmem>>, vector<128x128xf32>
    %cst_25 = arith.constant dense<0.000000e+00> : vector<8x128xf32>
    %30 = tpu.matmul %21, %29, %cst_25 {dimension_numbers = #tpu.dot_dimension_numbers<[1], [0], [0], [1], [0, 0, 1, 1], [], []>} : vector<8x128xf32>, vector<128x128xf32>, vector<8x128xf32> -> vector<8x128xf32>
    %31 = arith.addf %28, %30 : vector<8x128xf32>
    %32 = arith.addf %31, %6 : vector<8x128xf32>
    %33 = math.tanh %32 : vector<8x128xf32>
    %34 = vector.extract_strided_slice %5 {offsets = [24, 0], sizes = [8, 128], strides = [1, 1]} : vector<64x128xf32> to vector<8x128xf32>
    %c0_26 = arith.constant 0 : index
    %c0_27 = arith.constant 0 : index
    %35 = vector.load %arg3[%c0_26, %c0_27] : memref<128x128xf32, #tpu.memory_space<vmem>>, vector<128x128xf32>
    %cst_28 = arith.constant dense<0.000000e+00> : vector<8x128xf32>
    %36 = tpu.matmul %26, %35, %cst_28 {dimension_numbers = #tpu.dot_dimension_numbers<[1], [0], [0], [1], [0, 0, 1, 1], [], []>} : vector<8x128xf32>, vector<128x128xf32>, vector<8x128xf32> -> vector<8x128xf32>
    %37 = arith.addf %34, %36 : vector<8x128xf32>
    %38 = math.tanh %37 : vector<8x128xf32>
    %c0_29 = arith.constant 0 : index
    %c0_30 = arith.constant 0 : index
    %39 = vector.load %arg4[%c0_29, %c0_30] : memref<128x128xf32, #tpu.memory_space<vmem>>, vector<128x128xf32>
    %cst_31 = arith.constant dense<0.000000e+00> : vector<8x128xf32>
    %40 = tpu.matmul %26, %39, %cst_31 {dimension_numbers = #tpu.dot_dimension_numbers<[1], [0], [0], [1], [0, 0, 1, 1], [], []>} : vector<8x128xf32>, vector<128x128xf32>, vector<8x128xf32> -> vector<8x128xf32>
    %c0_32 = arith.constant 0 : index
    %c0_33 = arith.constant 0 : index
    %41 = vector.load %arg5[%c0_32, %c0_33] : memref<128x128xf32, #tpu.memory_space<vmem>>, vector<128x128xf32>
    %cst_34 = arith.constant dense<0.000000e+00> : vector<8x128xf32>
    %42 = tpu.matmul %33, %41, %cst_34 {dimension_numbers = #tpu.dot_dimension_numbers<[1], [0], [0], [1], [0, 0, 1, 1], [], []>} : vector<8x128xf32>, vector<128x128xf32>, vector<8x128xf32> -> vector<8x128xf32>
    %43 = arith.addf %40, %42 : vector<8x128xf32>
    %44 = arith.addf %43, %6 : vector<8x128xf32>
    %45 = math.tanh %44 : vector<8x128xf32>
    %46 = vector.extract_strided_slice %5 {offsets = [32, 0], sizes = [8, 128], strides = [1, 1]} : vector<64x128xf32> to vector<8x128xf32>
    %c0_35 = arith.constant 0 : index
    %c0_36 = arith.constant 0 : index
    %47 = vector.load %arg3[%c0_35, %c0_36] : memref<128x128xf32, #tpu.memory_space<vmem>>, vector<128x128xf32>
    %cst_37 = arith.constant dense<0.000000e+00> : vector<8x128xf32>
    %48 = tpu.matmul %38, %47, %cst_37 {dimension_numbers = #tpu.dot_dimension_numbers<[1], [0], [0], [1], [0, 0, 1, 1], [], []>} : vector<8x128xf32>, vector<128x128xf32>, vector<8x128xf32> -> vector<8x128xf32>
    %49 = arith.addf %46, %48 : vector<8x128xf32>
    %50 = math.tanh %49 : vector<8x128xf32>
    %c0_38 = arith.constant 0 : index
    %c0_39 = arith.constant 0 : index
    %51 = vector.load %arg4[%c0_38, %c0_39] : memref<128x128xf32, #tpu.memory_space<vmem>>, vector<128x128xf32>
    %cst_40 = arith.constant dense<0.000000e+00> : vector<8x128xf32>
    %52 = tpu.matmul %38, %51, %cst_40 {dimension_numbers = #tpu.dot_dimension_numbers<[1], [0], [0], [1], [0, 0, 1, 1], [], []>} : vector<8x128xf32>, vector<128x128xf32>, vector<8x128xf32> -> vector<8x128xf32>
    %c0_41 = arith.constant 0 : index
    %c0_42 = arith.constant 0 : index
    %53 = vector.load %arg5[%c0_41, %c0_42] : memref<128x128xf32, #tpu.memory_space<vmem>>, vector<128x128xf32>
    %cst_43 = arith.constant dense<0.000000e+00> : vector<8x128xf32>
    %54 = tpu.matmul %45, %53, %cst_43 {dimension_numbers = #tpu.dot_dimension_numbers<[1], [0], [0], [1], [0, 0, 1, 1], [], []>} : vector<8x128xf32>, vector<128x128xf32>, vector<8x128xf32> -> vector<8x128xf32>
    %55 = arith.addf %52, %54 : vector<8x128xf32>
    %56 = arith.addf %55, %6 : vector<8x128xf32>
    %57 = math.tanh %56 : vector<8x128xf32>
    %58 = vector.extract_strided_slice %5 {offsets = [40, 0], sizes = [8, 128], strides = [1, 1]} : vector<64x128xf32> to vector<8x128xf32>
    %c0_44 = arith.constant 0 : index
    %c0_45 = arith.constant 0 : index
    %59 = vector.load %arg3[%c0_44, %c0_45] : memref<128x128xf32, #tpu.memory_space<vmem>>, vector<128x128xf32>
    %cst_46 = arith.constant dense<0.000000e+00> : vector<8x128xf32>
    %60 = tpu.matmul %50, %59, %cst_46 {dimension_numbers = #tpu.dot_dimension_numbers<[1], [0], [0], [1], [0, 0, 1, 1], [], []>} : vector<8x128xf32>, vector<128x128xf32>, vector<8x128xf32> -> vector<8x128xf32>
    %61 = arith.addf %58, %60 : vector<8x128xf32>
    %62 = math.tanh %61 : vector<8x128xf32>
    %c0_47 = arith.constant 0 : index
    %c0_48 = arith.constant 0 : index
    %63 = vector.load %arg4[%c0_47, %c0_48] : memref<128x128xf32, #tpu.memory_space<vmem>>, vector<128x128xf32>
    %cst_49 = arith.constant dense<0.000000e+00> : vector<8x128xf32>
    %64 = tpu.matmul %50, %63, %cst_49 {dimension_numbers = #tpu.dot_dimension_numbers<[1], [0], [0], [1], [0, 0, 1, 1], [], []>} : vector<8x128xf32>, vector<128x128xf32>, vector<8x128xf32> -> vector<8x128xf32>
    %c0_50 = arith.constant 0 : index
    %c0_51 = arith.constant 0 : index
    %65 = vector.load %arg5[%c0_50, %c0_51] : memref<128x128xf32, #tpu.memory_space<vmem>>, vector<128x128xf32>
    %cst_52 = arith.constant dense<0.000000e+00> : vector<8x128xf32>
    %66 = tpu.matmul %57, %65, %cst_52 {dimension_numbers = #tpu.dot_dimension_numbers<[1], [0], [0], [1], [0, 0, 1, 1], [], []>} : vector<8x128xf32>, vector<128x128xf32>, vector<8x128xf32> -> vector<8x128xf32>
    %67 = arith.addf %64, %66 : vector<8x128xf32>
    %68 = arith.addf %67, %6 : vector<8x128xf32>
    %69 = math.tanh %68 : vector<8x128xf32>
    %70 = vector.extract_strided_slice %5 {offsets = [48, 0], sizes = [8, 128], strides = [1, 1]} : vector<64x128xf32> to vector<8x128xf32>
    %c0_53 = arith.constant 0 : index
    %c0_54 = arith.constant 0 : index
    %71 = vector.load %arg3[%c0_53, %c0_54] : memref<128x128xf32, #tpu.memory_space<vmem>>, vector<128x128xf32>
    %cst_55 = arith.constant dense<0.000000e+00> : vector<8x128xf32>
    %72 = tpu.matmul %62, %71, %cst_55 {dimension_numbers = #tpu.dot_dimension_numbers<[1], [0], [0], [1], [0, 0, 1, 1], [], []>} : vector<8x128xf32>, vector<128x128xf32>, vector<8x128xf32> -> vector<8x128xf32>
    %73 = arith.addf %70, %72 : vector<8x128xf32>
    %74 = math.tanh %73 : vector<8x128xf32>
    %c0_56 = arith.constant 0 : index
    %c0_57 = arith.constant 0 : index
    %75 = vector.load %arg4[%c0_56, %c0_57] : memref<128x128xf32, #tpu.memory_space<vmem>>, vector<128x128xf32>
    %cst_58 = arith.constant dense<0.000000e+00> : vector<8x128xf32>
    %76 = tpu.matmul %62, %75, %cst_58 {dimension_numbers = #tpu.dot_dimension_numbers<[1], [0], [0], [1], [0, 0, 1, 1], [], []>} : vector<8x128xf32>, vector<128x128xf32>, vector<8x128xf32> -> vector<8x128xf32>
    %c0_59 = arith.constant 0 : index
    %c0_60 = arith.constant 0 : index
    %77 = vector.load %arg5[%c0_59, %c0_60] : memref<128x128xf32, #tpu.memory_space<vmem>>, vector<128x128xf32>
    %cst_61 = arith.constant dense<0.000000e+00> : vector<8x128xf32>
    %78 = tpu.matmul %69, %77, %cst_61 {dimension_numbers = #tpu.dot_dimension_numbers<[1], [0], [0], [1], [0, 0, 1, 1], [], []>} : vector<8x128xf32>, vector<128x128xf32>, vector<8x128xf32> -> vector<8x128xf32>
    %79 = arith.addf %76, %78 : vector<8x128xf32>
    %80 = arith.addf %79, %6 : vector<8x128xf32>
    %81 = math.tanh %80 : vector<8x128xf32>
    %82 = vector.extract_strided_slice %5 {offsets = [56, 0], sizes = [8, 128], strides = [1, 1]} : vector<64x128xf32> to vector<8x128xf32>
    %c0_62 = arith.constant 0 : index
    %c0_63 = arith.constant 0 : index
    %83 = vector.load %arg3[%c0_62, %c0_63] : memref<128x128xf32, #tpu.memory_space<vmem>>, vector<128x128xf32>
    %cst_64 = arith.constant dense<0.000000e+00> : vector<8x128xf32>
    %84 = tpu.matmul %74, %83, %cst_64 {dimension_numbers = #tpu.dot_dimension_numbers<[1], [0], [0], [1], [0, 0, 1, 1], [], []>} : vector<8x128xf32>, vector<128x128xf32>, vector<8x128xf32> -> vector<8x128xf32>
    %85 = arith.addf %82, %84 : vector<8x128xf32>
    %86 = math.tanh %85 : vector<8x128xf32>
    %c0_65 = arith.constant 0 : index
    %c0_66 = arith.constant 0 : index
    %87 = vector.load %arg4[%c0_65, %c0_66] : memref<128x128xf32, #tpu.memory_space<vmem>>, vector<128x128xf32>
    %cst_67 = arith.constant dense<0.000000e+00> : vector<8x128xf32>
    %88 = tpu.matmul %74, %87, %cst_67 {dimension_numbers = #tpu.dot_dimension_numbers<[1], [0], [0], [1], [0, 0, 1, 1], [], []>} : vector<8x128xf32>, vector<128x128xf32>, vector<8x128xf32> -> vector<8x128xf32>
    %c0_68 = arith.constant 0 : index
    %c0_69 = arith.constant 0 : index
    %89 = vector.load %arg5[%c0_68, %c0_69] : memref<128x128xf32, #tpu.memory_space<vmem>>, vector<128x128xf32>
    %cst_70 = arith.constant dense<0.000000e+00> : vector<8x128xf32>
    %90 = tpu.matmul %81, %89, %cst_70 {dimension_numbers = #tpu.dot_dimension_numbers<[1], [0], [0], [1], [0, 0, 1, 1], [], []>} : vector<8x128xf32>, vector<128x128xf32>, vector<8x128xf32> -> vector<8x128xf32>
    %91 = arith.addf %88, %90 : vector<8x128xf32>
    %92 = arith.addf %91, %6 : vector<8x128xf32>
    %93 = math.tanh %92 : vector<8x128xf32>
    %c0_71 = arith.constant 0 : index
    %c0_72 = arith.constant 0 : index
    %94 = vector.load %arg4[%c0_71, %c0_72] : memref<128x128xf32, #tpu.memory_space<vmem>>, vector<128x128xf32>
    %cst_73 = arith.constant dense<0.000000e+00> : vector<8x128xf32>
    %95 = tpu.matmul %86, %94, %cst_73 {dimension_numbers = #tpu.dot_dimension_numbers<[1], [0], [0], [1], [0, 0, 1, 1], [], []>} : vector<8x128xf32>, vector<128x128xf32>, vector<8x128xf32> -> vector<8x128xf32>
    %c0_74 = arith.constant 0 : index
    %c0_75 = arith.constant 0 : index
    %96 = vector.load %arg5[%c0_74, %c0_75] : memref<128x128xf32, #tpu.memory_space<vmem>>, vector<128x128xf32>
    %cst_76 = arith.constant dense<0.000000e+00> : vector<8x128xf32>
    %97 = tpu.matmul %93, %96, %cst_76 {dimension_numbers = #tpu.dot_dimension_numbers<[1], [0], [0], [1], [0, 0, 1, 1], [], []>} : vector<8x128xf32>, vector<128x128xf32>, vector<8x128xf32> -> vector<8x128xf32>
    %98 = arith.addf %95, %97 : vector<8x128xf32>
    %99 = arith.addf %98, %6 : vector<8x128xf32>
    %100 = math.tanh %99 : vector<8x128xf32>
    %c0_77 = arith.constant 0 : index
    %c0_78 = arith.constant 0 : index
    %101 = vector.load %arg7[%c0_77, %c0_78] : memref<128x128xf32, #tpu.memory_space<vmem>>, vector<128x128xf32>
    %cst_79 = arith.constant dense<0.000000e+00> : vector<8x128xf32>
    %102 = tpu.matmul %100, %101, %cst_79 {dimension_numbers = #tpu.dot_dimension_numbers<[1], [0], [0], [1], [0, 0, 1, 1], [], []>} : vector<8x128xf32>, vector<128x128xf32>, vector<8x128xf32> -> vector<8x128xf32>
    %c0_80 = arith.constant 0 : index
    %c0_81 = arith.constant 0 : index
    %103 = vector.load %arg8[%c0_80, %c0_81] : memref<8x128xf32, #tpu.memory_space<vmem>>, vector<8x128xf32>
    %104 = arith.addf %102, %103 : vector<8x128xf32>
    %c0_82 = arith.constant 0 : index
    %c0_83 = arith.constant 0 : index
    %105 = vector.load %arg9[%c0_82, %c0_83] : memref<8x128xf32, #tpu.memory_space<vmem>>, vector<8x128xf32>
    tpu.vector_store %arg9[%c0_82, %c0_83], %104 {strides = array<i32>} : memref<8x128xf32, #tpu.memory_space<vmem>>, vector<8x128xf32>,
    return
  }
}

</mosaic_0001>

<llo_original>
// kernel: rnn_forward.1
$region0: #{rnn_forward.1}
  #allocation0 [shape = 'u32[]', space=smem, size = 0x4, offset = 0x4, fixed_abs, tag = 'smem constant byte address 0x4 - core index']
  #allocation1 [shape = 'u32[144,128]{1,0:T(1,128)}', space=vmem, size = 0x12000, scoped, tag = 'internal scratch']
  %s0 = inlined_call_operand.vmem [shape: f32[64,128], index: 0, kind: input, shape index: {}]
  %s1 = inlined_call_operand.vmem [shape: f32[128,128], index: 1, kind: input, shape index: {}]
  %s2 = inlined_call_operand.vmem [shape: f32[1,128], index: 2, kind: input, shape index: {}]
  %s3 = inlined_call_operand.vmem [shape: f32[128,128], index: 3, kind: input, shape index: {}]
  %s4 = inlined_call_operand.vmem [shape: f32[128,128], index: 4, kind: input, shape index: {}]
  %s5 = inlined_call_operand.vmem [shape: f32[128,128], index: 5, kind: input, shape index: {}]
  %s6 = inlined_call_operand.vmem [shape: f32[8,128], index: 6, kind: input, shape index: {}]
  %s7 = inlined_call_operand.vmem [shape: f32[128,128], index: 7, kind: input, shape index: {}]
  %s8 = inlined_call_operand.vmem [shape: f32[8,128], index: 8, kind: input, shape index: {}]
  %s9 = inlined_call_operand.vmem [shape: f32[8,128], index: 9, kind: output, shape index: {}]
  %s10 = sld [smem:[#allocation0]]
  $region46: #{rnn_forward.1} parent=0
    _
  %s12 = ssub.s32 1, %s10
  %s13 = scalar_select 0, %s12, %s10
  // Predicated region
  $region2: #{rnn_forward.1} parent=0 // pred_check
    _
  $region3: #{rnn_forward.1} parent=0 // pred_check_branch
    %15 = sbr.rel (0) target = $region5
  $region4: #{rnn_forward.1} parent=0 // pred_region
    _
  $region5: #{rnn_forward.1} parent=0 // pred_fallthru
    _
  // Predicated region
  $region6: #{rnn_forward.1} parent=0 // pred_check
    _
  $region7: #{rnn_forward.1} parent=0 // pred_check_branch
    %17 = sbr.rel (0) target = $region9
  $region8: #{rnn_forward.1} parent=0 // pred_region
    _
  $region9: #{rnn_forward.1} parent=0 // pred_fallthru
    _
  // Predicated region
  $region10: #{rnn_forward.1} parent=0 // pred_check
    _
  $region11: #{rnn_forward.1} parent=0 // pred_check_branch
    %19 = sbr.rel (0) target = $region13
  $region12: #{rnn_forward.1} parent=0 // pred_region
    _
  $region13: #{rnn_forward.1} parent=0 // pred_fallthru
    _
  // Predicated region
  $region14: #{rnn_forward.1} parent=0 // pred_check
    _
  $region15: #{rnn_forward.1} parent=0 // pred_check_branch
    %21 = sbr.rel (0) target = $region17
  $region16: #{rnn_forward.1} parent=0 // pred_region
    _
  $region17: #{rnn_forward.1} parent=0 // pred_fallthru
    _
  // Predicated region
  $region18: #{rnn_forward.1} parent=0 // pred_check
    _
  $region19: #{rnn_forward.1} parent=0 // pred_check_branch
    %23 = sbr.rel (0) target = $region21
  $region20: #{rnn_forward.1} parent=0 // pred_region
    _
  $region21: #{rnn_forward.1} parent=0 // pred_fallthru
    _
  // Predicated region
  $region22: #{rnn_forward.1} parent=0 // pred_check
    _
  $region23: #{rnn_forward.1} parent=0 // pred_check_branch
    %25 = sbr.rel (0) target = $region25
  $region24: #{rnn_forward.1} parent=0 // pred_region
    _
  $region25: #{rnn_forward.1} parent=0 // pred_fallthru
    _
  // Predicated region
  $region26: #{rnn_forward.1} parent=0 // pred_check
    _
  $region27: #{rnn_forward.1} parent=0 // pred_check_branch
    %27 = sbr.rel (0) target = $region29
  $region28: #{rnn_forward.1} parent=0 // pred_region
    _
  $region29: #{rnn_forward.1} parent=0 // pred_fallthru
    _
  // Predicated region
  $region30: #{rnn_forward.1} parent=0 // pred_check
    _
  $region31: #{rnn_forward.1} parent=0 // pred_check_branch
    %29 = sbr.rel (0) target = $region33
  $region32: #{rnn_forward.1} parent=0 // pred_region
    _
  $region33: #{rnn_forward.1} parent=0 // pred_fallthru
    _
  // Predicated region
  $region34: #{rnn_forward.1} parent=0 // pred_check
    _
  $region35: #{rnn_forward.1} parent=0 // pred_check_branch
    %31 = sbr.rel (0) target = $region37
  $region36: #{rnn_forward.1} parent=0 // pred_region
    _
  $region37: #{rnn_forward.1} parent=0 // pred_fallthru
    _
  %v32 = vld [vmem:[%s0] sm:$0xff]
  %v33 = vld [vmem:[%s0 + $0x8] sm:$0xff]
  %v34 = vld [vmem:[%s0 + $0x10] sm:$0xff]
  %v35 = vld [vmem:[%s0 + $0x18] sm:$0xff]
  %v36 = vld [vmem:[%s0 + $0x20] sm:$0xff]
  %v37 = vld [vmem:[%s0 + $0x28] sm:$0xff]
  %v38 = vld [vmem:[%s0 + $0x30] sm:$0xff]
  %v39 = vld [vmem:[%s0 + $0x38] sm:$0xff]
  %v40 = vld [vmem:[%s1] sm:$0xff]
  %v41 = vld [vmem:[%s1 + $0x8] sm:$0xff]
  %v42 = vld [vmem:[%s1 + $0x10] sm:$0xff]
  %v43 = vld [vmem:[%s1 + $0x18] sm:$0xff]
  %v44 = vld [vmem:[%s1 + $0x20] sm:$0xff]
  %v45 = vld [vmem:[%s1 + $0x28] sm:$0xff]
  %v46 = vld [vmem:[%s1 + $0x30] sm:$0xff]
  %v47 = vld [vmem:[%s1 + $0x38] sm:$0xff]
  %v48 = vld [vmem:[%s1 + $0x40] sm:$0xff]
  %v49 = vld [vmem:[%s1 + $0x48] sm:$0xff]
  %v50 = vld [vmem:[%s1 + $0x50] sm:$0xff]
  %v51 = vld [vmem:[%s1 + $0x58] sm:$0xff]
  %v52 = vld [vmem:[%s1 + $0x60] sm:$0xff]
  %v53 = vld [vmem:[%s1 + $0x68] sm:$0xff]
  %v54 = vld [vmem:[%s1 + $0x70] sm:$0xff]
  %v55 = vld [vmem:[%s1 + $0x78] sm:$0xff]
  %v56 = vld [vmem:[%s2] sm:$0x1]
  %v58 = vlaneseq
  %v59 = vshrl.u32 %v58, 7
  %v60 = vsub.s32 0, %v59
  %v61 = vrot.slane %v56, %v60
  %63 = vmatprep.subr.mxu0 0.0
  %64 = vmatpush1.msra.mxu0 %v55
  %65 = vmatprep.subr.mxu0 0.0
  %66 = vmatpush1.msra.mxu0 %v54
  %67 = vmatprep.subr.mxu0 0.0
  %68 = vmatpush1.msra.mxu0 %v53
  %69 = vmatprep.subr.mxu0 0.0
  %70 = vmatpush1.msra.mxu0 %v52
  %71 = vmatprep.subr.mxu0 0.0
  %72 = vmatpush1.msra.mxu0 %v51
  %73 = vmatprep.subr.mxu0 0.0
  %74 = vmatpush1.msra.mxu0 %v50
  %75 = vmatprep.subr.mxu0 0.0
  %76 = vmatpush1.msra.mxu0 %v49
  %77 = vmatprep.subr.mxu0 0.0
  %78 = vmatpush1.msra.mxu0 %v48
  %79 = vmatprep.subr.mxu0 0.0
  %80 = vmatpush1.msra.mxu0 %v47
  %81 = vmatprep.subr.mxu0 0.0
  %82 = vmatpush1.msra.mxu0 %v46
  %83 = vmatprep.subr.mxu0 0.0
  %84 = vmatpush1.msra.mxu0 %v45
  %85 = vmatprep.subr.mxu0 0.0
  %86 = vmatpush1.msra.mxu0 %v44
  %87 = vmatprep.subr.mxu0 0.0
  %88 = vmatpush1.msra.mxu0 %v43
  %89 = vmatprep.subr.mxu0 0.0
  %90 = vmatpush1.msra.mxu0 %v42
  %91 = vmatprep.subr.mxu0 0.0
  %92 = vmatpush1.msra.mxu0 %v41
  %93 = vmatprep.subr.mxu0 0.0
  %94 = vmatpush1.msra.mxu0 %v40
  %95 = vmatprep.subr.mxu0 0.0
  %96 = vmatpush2.msra.mxu0 0.0
  %97 = vmatprep.subr.mxu0 0.0
  %98 = vmatpush2.msra.mxu0 0.0
  %99 = vmatprep.subr.mxu0 0.0
  %100 = vmatpush2.msra.mxu0 0.0
  %101 = vmatprep.subr.mxu0 0.0
  %102 = vmatpush2.msra.mxu0 0.0
  %103 = vmatprep.subr.mxu0 0.0
  %104 = vmatpush2.msra.mxu0 0.0
  %105 = vmatprep.subr.mxu0 0.0
  %106 = vmatpush2.msra.mxu0 0.0
  %107 = vmatprep.subr.mxu0 0.0
  %108 = vmatpush2.msra.mxu0 0.0
  %109 = vmatprep.subr.mxu0 0.0
  %110 = vmatpush2.msra.mxu0 0.0
  %111 = vmatprep.subr.mxu0 0.0
  %112 = vmatpush2.msra.mxu0 0.0
  %113 = vmatprep.subr.mxu0 0.0
  %114 = vmatpush2.msra.mxu0 0.0
  %115 = vmatprep.subr.mxu0 0.0
  %116 = vmatpush2.msra.mxu0 0.0
  %117 = vmatprep.subr.mxu0 0.0
  %118 = vmatpush2.msra.mxu0 0.0
  %119 = vmatprep.subr.mxu0 0.0
  %120 = vmatpush2.msra.mxu0 0.0
  %121 = vmatprep.subr.mxu0 0.0
  %122 = vmatpush2.msra.mxu0 0.0
  %123 = vmatprep.subr.mxu0 0.0
  %124 = vmatpush2.msra.mxu0 0.0
  %125 = vmatprep.subr.mxu0 0.0
  %126 = vmatpush2.msra.mxu0 0.0
  %127 = vmatprep.mubr.f32.mxu0 0.0
  %128 = vmatmul.mubr.f32.gmra.mxu0 %v32
  %v129 = vpop.f32.mrf.mxu0
  %v130 = vadd.f32 %v61, %v129
  %v131 = vpop.f32.mrf.mxu0
  %132 = vmatprep.mubr.f32.mxu0 0.0
  %133 = vmatmul.mubr.f32.gmra.mxu0 %v33
  %v134 = vpop.f32.mrf.mxu0
  %v135 = vadd.f32 %v61, %v134
  %v136 = vpop.f32.mrf.mxu0
  %137 = vmatprep.mubr.f32.mxu0 0.0
  %138 = vmatmul.mubr.f32.gmra.mxu0 %v34
  %v139 = vpop.f32.mrf.mxu0
  %v140 = vadd.f32 %v61, %v139
  %v141 = vpop.f32.mrf.mxu0
  %142 = vmatprep.mubr.f32.mxu0 0.0
  %143 = vmatmul.mubr.f32.gmra.mxu0 %v35
  %v144 = vpop.f32.mrf.mxu0
  %v145 = vadd.f32 %v61, %v144
  %v146 = vpop.f32.mrf.mxu0
  %147 = vmatprep.mubr.f32.mxu0 0.0
  %148 = vmatmul.mubr.f32.gmra.mxu0 %v36
  %v149 = vpop.f32.mrf.mxu0
  %v150 = vadd.f32 %v61, %v149
  %v151 = vpop.f32.mrf.mxu0
  %152 = vmatprep.mubr.f32.mxu0 0.0
  %153 = vmatmul.mubr.f32.gmra.mxu0 %v37
  %v154 = vpop.f32.mrf.mxu0
  %v155 = vadd.f32 %v61, %v154
  %v156 = vpop.f32.mrf.mxu0
  %157 = vmatprep.mubr.f32.mxu0 0.0
  %158 = vmatmul.mubr.f32.gmra.mxu0 %v38
  %v159 = vpop.f32.mrf.mxu0
  %v160 = vadd.f32 %v61, %v159
  %v161 = vpop.f32.mrf.mxu0
  %162 = vmatprep.mubr.f32.mxu0 0.0
  %163 = vmatmul.mubr.f32.gmra.mxu0 %v39
  %v164 = vpop.f32.mrf.mxu0
  %v165 = vadd.f32 %v61, %v164
  %v166 = vpop.f32.mrf.mxu0
  %167 = vdwg.mxu0
  %v168 = vld [vmem:[%s6] sm:$0xff]
  %v169 = vtanh.pop %v130
  %v170 = vld [vmem:[%s3] sm:$0xff]
  %v171 = vld [vmem:[%s3 + $0x8] sm:$0xff]
  %v172 = vld [vmem:[%s3 + $0x10] sm:$0xff]
  %v173 = vld [vmem:[%s3 + $0x18] sm:$0xff]
  %v174 = vld [vmem:[%s3 + $0x20] sm:$0xff]
  %v175 = vld [vmem:[%s3 + $0x28] sm:$0xff]
  %v176 = vld [vmem:[%s3 + $0x30] sm:$0xff]
  %v177 = vld [vmem:[%s3 + $0x38] sm:$0xff]
  %v178 = vld [vmem:[%s3 + $0x40] sm:$0xff]
  %v179 = vld [vmem:[%s3 + $0x48] sm:$0xff]
  %v180 = vld [vmem:[%s3 + $0x50] sm:$0xff]
  %v181 = vld [vmem:[%s3 + $0x58] sm:$0xff]
  %v182 = vld [vmem:[%s3 + $0x60] sm:$0xff]
  %v183 = vld [vmem:[%s3 + $0x68] sm:$0xff]
  %v184 = vld [vmem:[%s3 + $0x70] sm:$0xff]
  %v185 = vld [vmem:[%s3 + $0x78] sm:$0xff]
  %186 = vmatprep.subr.mxu0 0.0
  %187 = vmatpush1.msra.mxu0 %v185
  %188 = vmatprep.subr.mxu0 0.0
  %189 = vmatpush1.msra.mxu0 %v184
  %190 = vmatprep.subr.mxu0 0.0
  %191 = vmatpush1.msra.mxu0 %v183
  %192 = vmatprep.subr.mxu0 0.0
  %193 = vmatpush1.msra.mxu0 %v182
  %194 = vmatprep.subr.mxu0 0.0
  %195 = vmatpush1.msra.mxu0 %v181
  %196 = vmatprep.subr.mxu0 0.0
  %197 = vmatpush1.msra.mxu0 %v180
  %198 = vmatprep.subr.mxu0 0.0
  %199 = vmatpush1.msra.mxu0 %v179
  %200 = vmatprep.subr.mxu0 0.0
  %201 = vmatpush1.msra.mxu0 %v178
  %202 = vmatprep.subr.mxu0 0.0
  %203 = vmatpush1.msra.mxu0 %v177
  %204 = vmatprep.subr.mxu0 0.0
  %205 = vmatpush1.msra.mxu0 %v176
  %206 = vmatprep.subr.mxu0 0.0
  %207 = vmatpush1.msra.mxu0 %v175
  %208 = vmatprep.subr.mxu0 0.0
  %209 = vmatpush1.msra.mxu0 %v174
  %210 = vmatprep.subr.mxu0 0.0
  %211 = vmatpush1.msra.mxu0 %v173
  %212 = vmatprep.subr.mxu0 0.0
  %213 = vmatpush1.msra.mxu0 %v172
  %214 = vmatprep.subr.mxu0 0.0
  %215 = vmatpush1.msra.mxu0 %v171
  %216 = vmatprep.subr.mxu0 0.0
  %217 = vmatpush1.msra.mxu0 %v170
  %218 = vmatprep.subr.mxu0 0.0
  %219 = vmatpush2.msra.mxu0 0.0
  %220 = vmatprep.subr.mxu0 0.0
  %221 = vmatpush2.msra.mxu0 0.0
  %222 = vmatprep.subr.mxu0 0.0
  %223 = vmatpush2.msra.mxu0 0.0
  %224 = vmatprep.subr.mxu0 0.0
  %225 = vmatpush2.msra.mxu0 0.0
  %226 = vmatprep.subr.mxu0 0.0
  %227 = vmatpush2.msra.mxu0 0.0
  %228 = vmatprep.subr.mxu0 0.0
  %229 = vmatpush2.msra.mxu0 0.0
  %230 = vmatprep.subr.mxu0 0.0
  %231 = vmatpush2.msra.mxu0 0.0
  %232 = vmatprep.subr.mxu0 0.0
  %233 = vmatpush2.msra.mxu0 0.0
  %234 = vmatprep.subr.mxu0 0.0
  %235 = vmatpush2.msra.mxu0 0.0
  %236 = vmatprep.subr.mxu0 0.0
  %237 = vmatpush2.msra.mxu0 0.0
  %238 = vmatprep.subr.mxu0 0.0
  %239 = vmatpush2.msra.mxu0 0.0
  %240 = vmatprep.subr.mxu0 0.0
  %241 = vmatpush2.msra.mxu0 0.0
  %242 = vmatprep.subr.mxu0 0.0
  %243 = vmatpush2.msra.mxu0 0.0
  %244 = vmatprep.subr.mxu0 0.0
  %245 = vmatpush2.msra.mxu0 0.0
  %246 = vmatprep.subr.mxu0 0.0
  %247 = vmatpush2.msra.mxu0 0.0
  %248 = vmatprep.subr.mxu0 0.0
  %249 = vmatpush2.msra.mxu0 0.0
  %250 = vmatprep.mubr.f32.mxu0 0.0
  %251 = vmatmul.mubr.f32.gmra.mxu0 %v169
  %v252 = vpop.f32.mrf.mxu0
  %v253 = vadd.f32 0.0, %v252
  %v254 = vpop.f32.mrf.mxu0
  %255 = vdwg.mxu0
  %v256 = vadd.f32 %v135, %v253
  %v257 = vtanh.pop %v256
  %v258 = vld [vmem:[%s4] sm:$0xff]
  %v259 = vld [vmem:[%s4 + $0x8] sm:$0xff]
  %v260 = vld [vmem:[%s4 + $0x10] sm:$0xff]
  %v261 = vld [vmem:[%s4 + $0x18] sm:$0xff]
  %v262 = vld [vmem:[%s4 + $0x20] sm:$0xff]
  %v263 = vld [vmem:[%s4 + $0x28] sm:$0xff]
  %v264 = vld [vmem:[%s4 + $0x30] sm:$0xff]
  %v265 = vld [vmem:[%s4 + $0x38] sm:$0xff]
  %v266 = vld [vmem:[%s4 + $0x40] sm:$0xff]
  %v267 = vld [vmem:[%s4 + $0x48] sm:$0xff]
  %v268 = vld [vmem:[%s4 + $0x50] sm:$0xff]
  %v269 = vld [vmem:[%s4 + $0x58] sm:$0xff]
  %v270 = vld [vmem:[%s4 + $0x60] sm:$0xff]
  %v271 = vld [vmem:[%s4 + $0x68] sm:$0xff]
  %v272 = vld [vmem:[%s4 + $0x70] sm:$0xff]
  %v273 = vld [vmem:[%s4 + $0x78] sm:$0xff]
  %v274 = vld [vmem:[%s5] sm:$0xff]
  %v275 = vld [vmem:[%s5 + $0x8] sm:$0xff]
  %v276 = vld [vmem:[%s5 + $0x10] sm:$0xff]
  %v277 = vld [vmem:[%s5 + $0x18] sm:$0xff]
  %v278 = vld [vmem:[%s5 + $0x20] sm:$0xff]
  %v279 = vld [vmem:[%s5 + $0x28] sm:$0xff]
  %v280 = vld [vmem:[%s5 + $0x30] sm:$0xff]
  %v281 = vld [vmem:[%s5 + $0x38] sm:$0xff]
  %v282 = vld [vmem:[%s5 + $0x40] sm:$0xff]
  %v283 = vld [vmem:[%s5 + $0x48] sm:$0xff]
  %v284 = vld [vmem:[%s5 + $0x50] sm:$0xff]
  %v285 = vld [vmem:[%s5 + $0x58] sm:$0xff]
  %v286 = vld [vmem:[%s5 + $0x60] sm:$0xff]
  %v287 = vld [vmem:[%s5 + $0x68] sm:$0xff]
  %v288 = vld [vmem:[%s5 + $0x70] sm:$0xff]
  %v289 = vld [vmem:[%s5 + $0x78] sm:$0xff]
  %290 = vmatprep.subr.mxu0 0.0
  %291 = vmatpush1.msra.mxu0 %v289
  %292 = vmatprep.subr.mxu0 0.0
  %293 = vmatpush1.msra.mxu0 %v288
  %294 = vmatprep.subr.mxu0 0.0
  %295 = vmatpush1.msra.mxu0 %v287
  %296 = vmatprep.subr.mxu0 0.0
  %297 = vmatpush1.msra.mxu0 %v286
  %298 = vmatprep.subr.mxu0 0.0
  %299 = vmatpush1.msra.mxu0 %v285
  %300 = vmatprep.subr.mxu0 0.0
  %301 = vmatpush1.msra.mxu0 %v284
  %302 = vmatprep.subr.mxu0 0.0
  %303 = vmatpush1.msra.mxu0 %v283
  %304 = vmatprep.subr.mxu0 0.0
  %305 = vmatpush1.msra.mxu0 %v282
  %306 = vmatprep.subr.mxu0 0.0
  %307 = vmatpush1.msra.mxu0 %v281
  %308 = vmatprep.subr.mxu0 0.0
  %309 = vmatpush1.msra.mxu0 %v280
  %310 = vmatprep.subr.mxu0 0.0
  %311 = vmatpush1.msra.mxu0 %v279
  %312 = vmatprep.subr.mxu0 0.0
  %313 = vmatpush1.msra.mxu0 %v278
  %314 = vmatprep.subr.mxu0 0.0
  %315 = vmatpush1.msra.mxu0 %v277
  %316 = vmatprep.subr.mxu0 0.0
  %317 = vmatpush1.msra.mxu0 %v276
  %318 = vmatprep.subr.mxu0 0.0
  %319 = vmatpush1.msra.mxu0 %v275
  %320 = vmatprep.subr.mxu0 0.0
  %321 = vmatpush1.msra.mxu0 %v274
  %322 = vmatprep.subr.mxu0 0.0
  %323 = vmatpush2.msra.mxu0 0.0
  %324 = vmatprep.subr.mxu0 0.0
  %325 = vmatpush2.msra.mxu0 0.0
  %326 = vmatprep.subr.mxu0 0.0
  %327 = vmatpush2.msra.mxu0 0.0
  %328 = vmatprep.subr.mxu0 0.0
  %329 = vmatpush2.msra.mxu0 0.0
  %330 = vmatprep.subr.mxu0 0.0
  %331 = vmatpush2.msra.mxu0 0.0
  %332 = vmatprep.subr.mxu0 0.0
  %333 = vmatpush2.msra.mxu0 0.0
  %334 = vmatprep.subr.mxu0 0.0
  %335 = vmatpush2.msra.mxu0 0.0
  %336 = vmatprep.subr.mxu0 0.0
  %337 = vmatpush2.msra.mxu0 0.0
  %338 = vmatprep.subr.mxu0 0.0
  %339 = vmatpush2.msra.mxu0 0.0
  %340 = vmatprep.subr.mxu0 0.0
  %341 = vmatpush2.msra.mxu0 0.0
  %342 = vmatprep.subr.mxu0 0.0
  %343 = vmatpush2.msra.mxu0 0.0
  %344 = vmatprep.subr.mxu0 0.0
  %345 = vmatpush2.msra.mxu0 0.0
  %346 = vmatprep.subr.mxu0 0.0
  %347 = vmatpush2.msra.mxu0 0.0
  %348 = vmatprep.subr.mxu0 0.0
  %349 = vmatpush2.msra.mxu0 0.0
  %350 = vmatprep.subr.mxu0 0.0
  %351 = vmatpush2.msra.mxu0 0.0
  %352 = vmatprep.subr.mxu0 0.0
  %353 = vmatpush2.msra.mxu0 0.0
  %354 = vmatprep.mubr.f32.mxu0 0.0
  %355 = vmatmul.mubr.f32.gmra.mxu0 0.0
  %v356 = vpop.f32.mrf.mxu0
  %v357 = vadd.f32 0.0, %v356
  %v358 = vpop.f32.mrf.mxu0
  %359 = vdwg.mxu0
  %360 = vmatprep.subr.mxu0 0.0
  %361 = vmatpush1.msra.mxu0 %v273
  %362 = vmatprep.subr.mxu0 0.0
  %363 = vmatpush1.msra.mxu0 %v272
  %364 = vmatprep.subr.mxu0 0.0
  %365 = vmatpush1.msra.mxu0 %v271
  %366 = vmatprep.subr.mxu0 0.0
  %367 = vmatpush1.msra.mxu0 %v270
  %368 = vmatprep.subr.mxu0 0.0
  %369 = vmatpush1.msra.mxu0 %v269
  %370 = vmatprep.subr.mxu0 0.0
  %371 = vmatpush1.msra.mxu0 %v268
  %372 = vmatprep.subr.mxu0 0.0
  %373 = vmatpush1.msra.mxu0 %v267
  %374 = vmatprep.subr.mxu0 0.0
  %375 = vmatpush1.msra.mxu0 %v266
  %376 = vmatprep.subr.mxu0 0.0
  %377 = vmatpush1.msra.mxu0 %v265
  %378 = vmatprep.subr.mxu0 0.0
  %379 = vmatpush1.msra.mxu0 %v264
  %380 = vmatprep.subr.mxu0 0.0
  %381 = vmatpush1.msra.mxu0 %v263
  %382 = vmatprep.subr.mxu0 0.0
  %383 = vmatpush1.msra.mxu0 %v262
  %384 = vmatprep.subr.mxu0 0.0
  %385 = vmatpush1.msra.mxu0 %v261
  %386 = vmatprep.subr.mxu0 0.0
  %387 = vmatpush1.msra.mxu0 %v260
  %388 = vmatprep.subr.mxu0 0.0
  %389 = vmatpush1.msra.mxu0 %v259
  %390 = vmatprep.subr.mxu0 0.0
  %391 = vmatpush1.msra.mxu0 %v258
  %392 = vmatprep.subr.mxu0 0.0
  %393 = vmatpush2.msra.mxu0 0.0
  %394 = vmatprep.subr.mxu0 0.0
  %395 = vmatpush2.msra.mxu0 0.0
  %396 = vmatprep.subr.mxu0 0.0
  %397 = vmatpush2.msra.mxu0 0.0
  %398 = vmatprep.subr.mxu0 0.0
  %399 = vmatpush2.msra.mxu0 0.0
  %400 = vmatprep.subr.mxu0 0.0
  %401 = vmatpush2.msra.mxu0 0.0
  %402 = vmatprep.subr.mxu0 0.0
  %403 = vmatpush2.msra.mxu0 0.0
  %404 = vmatprep.subr.mxu0 0.0
  %405 = vmatpush2.msra.mxu0 0.0
  %406 = vmatprep.subr.mxu0 0.0
  %407 = vmatpush2.msra.mxu0 0.0
  %408 = vmatprep.subr.mxu0 0.0
  %409 = vmatpush2.msra.mxu0 0.0
  %410 = vmatprep.subr.mxu0 0.0
  %411 = vmatpush2.msra.mxu0 0.0
  %412 = vmatprep.subr.mxu0 0.0
  %413 = vmatpush2.msra.mxu0 0.0
  %414 = vmatprep.subr.mxu0 0.0
  %415 = vmatpush2.msra.mxu0 0.0
  %416 = vmatprep.subr.mxu0 0.0
  %417 = vmatpush2.msra.mxu0 0.0
  %418 = vmatprep.subr.mxu0 0.0
  %419 = vmatpush2.msra.mxu0 0.0
  %420 = vmatprep.subr.mxu0 0.0
  %421 = vmatpush2.msra.mxu0 0.0
  %422 = vmatprep.subr.mxu0 0.0
  %423 = vmatpush2.msra.mxu0 0.0
  %424 = vmatprep.mubr.f32.mxu0 0.0
  %425 = vmatmul.mubr.f32.gmra.mxu0 %v169
  %v426 = vpop.f32.mrf.mxu0
  %v427 = vadd.f32 %v357, %v426
  %v428 = vpop.f32.mrf.mxu0
  %429 = vdwg.mxu0
  %v430 = vadd.f32 %v427, %v168
  %v431 = vtanh.pop %v430
  %432 = vmatprep.subr.mxu0 0.0
  %433 = vmatpush1.msra.mxu0 %v185
  %434 = vmatprep.subr.mxu0 0.0
  %435 = vmatpush1.msra.mxu0 %v184
  %436 = vmatprep.subr.mxu0 0.0
  %437 = vmatpush1.msra.mxu0 %v183
  %438 = vmatprep.subr.mxu0 0.0
  %439 = vmatpush1.msra.mxu0 %v182
  %440 = vmatprep.subr.mxu0 0.0
  %441 = vmatpush1.msra.mxu0 %v181
  %442 = vmatprep.subr.mxu0 0.0
  %443 = vmatpush1.msra.mxu0 %v180
  %444 = vmatprep.subr.mxu0 0.0
  %445 = vmatpush1.msra.mxu0 %v179
  %446 = vmatprep.subr.mxu0 0.0
  %447 = vmatpush1.msra.mxu0 %v178
  %448 = vmatprep.subr.mxu0 0.0
  %449 = vmatpush1.msra.mxu0 %v177
  %450 = vmatprep.subr.mxu0 0.0
  %451 = vmatpush1.msra.mxu0 %v176
  %452 = vmatprep.subr.mxu0 0.0
  %453 = vmatpush1.msra.mxu0 %v175
  %454 = vmatprep.subr.mxu0 0.0
  %455 = vmatpush1.msra.mxu0 %v174
  %456 = vmatprep.subr.mxu0 0.0
  %457 = vmatpush1.msra.mxu0 %v173
  %458 = vmatprep.subr.mxu0 0.0
  %459 = vmatpush1.msra.mxu0 %v172
  %460 = vmatprep.subr.mxu0 0.0
  %461 = vmatpush1.msra.mxu0 %v171
  %462 = vmatprep.subr.mxu0 0.0
  %463 = vmatpush1.msra.mxu0 %v170
  %464 = vmatprep.subr.mxu0 0.0
  %465 = vmatpush2.msra.mxu0 0.0
  %466 = vmatprep.subr.mxu0 0.0
  %467 = vmatpush2.msra.mxu0 0.0
  %468 = vmatprep.subr.mxu0 0.0
  %469 = vmatpush2.msra.mxu0 0.0
  %470 = vmatprep.subr.mxu0 0.0
  %471 = vmatpush2.msra.mxu0 0.0
  %472 = vmatprep.subr.mxu0 0.0
  %473 = vmatpush2.msra.mxu0 0.0
  %474 = vmatprep.subr.mxu0 0.0
  %475 = vmatpush2.msra.mxu0 0.0
  %476 = vmatprep.subr.mxu0 0.0
  %477 = vmatpush2.msra.mxu0 0.0
  %478 = vmatprep.subr.mxu0 0.0
  %479 = vmatpush2.msra.mxu0 0.0
  %480 = vmatprep.subr.mxu0 0.0
  %481 = vmatpush2.msra.mxu0 0.0
  %482 = vmatprep.subr.mxu0 0.0
  %483 = vmatpush2.msra.mxu0 0.0
  %484 = vmatprep.subr.mxu0 0.0
  %485 = vmatpush2.msra.mxu0 0.0
  %486 = vmatprep.subr.mxu0 0.0
  %487 = vmatpush2.msra.mxu0 0.0
  %488 = vmatprep.subr.mxu0 0.0
  %489 = vmatpush2.msra.mxu0 0.0
  %490 = vmatprep.subr.mxu0 0.0
  %491 = vmatpush2.msra.mxu0 0.0
  %492 = vmatprep.subr.mxu0 0.0
  %493 = vmatpush2.msra.mxu0 0.0
  %494 = vmatprep.subr.mxu0 0.0
  %495 = vmatpush2.msra.mxu0 0.0
  %496 = vmatprep.mubr.f32.mxu0 0.0
  %497 = vmatmul.mubr.f32.gmra.mxu0 %v257
  %v498 = vpop.f32.mrf.mxu0
  %v499 = vadd.f32 0.0, %v498
  %v500 = vpop.f32.mrf.mxu0
  %501 = vdwg.mxu0
  %v502 = vadd.f32 %v140, %v499
  %v503 = vtanh.pop %v502
  %504 = vmatprep.subr.mxu0 0.0
  %505 = vmatpush1.msra.mxu0 %v289
  %506 = vmatprep.subr.mxu0 0.0
  %507 = vmatpush1.msra.mxu0 %v288
  %508 = vmatprep.subr.mxu0 0.0
  %509 = vmatpush1.msra.mxu0 %v287
  %510 = vmatprep.subr.mxu0 0.0
  %511 = vmatpush1.msra.mxu0 %v286
  %512 = vmatprep.subr.mxu0 0.0
  %513 = vmatpush1.msra.mxu0 %v285
  %514 = vmatprep.subr.mxu0 0.0
  %515 = vmatpush1.msra.mxu0 %v284
  %516 = vmatprep.subr.mxu0 0.0
  %517 = vmatpush1.msra.mxu0 %v283
  %518 = vmatprep.subr.mxu0 0.0
  %519 = vmatpush1.msra.mxu0 %v282
  %520 = vmatprep.subr.mxu0 0.0
  %521 = vmatpush1.msra.mxu0 %v281
  %522 = vmatprep.subr.mxu0 0.0
  %523 = vmatpush1.msra.mxu0 %v280
  %524 = vmatprep.subr.mxu0 0.0
  %525 = vmatpush1.msra.mxu0 %v279
  %526 = vmatprep.subr.mxu0 0.0
  %527 = vmatpush1.msra.mxu0 %v278
  %528 = vmatprep.subr.mxu0 0.0
  %529 = vmatpush1.msra.mxu0 %v277
  %530 = vmatprep.subr.mxu0 0.0
  %531 = vmatpush1.msra.mxu0 %v276
  %532 = vmatprep.subr.mxu0 0.0
  %533 = vmatpush1.msra.mxu0 %v275
  %534 = vmatprep.subr.mxu0 0.0
  %535 = vmatpush1.msra.mxu0 %v274
  %536 = vmatprep.subr.mxu0 0.0
  %537 = vmatpush2.msra.mxu0 0.0
  %538 = vmatprep.subr.mxu0 0.0
  %539 = vmatpush2.msra.mxu0 0.0
  %540 = vmatprep.subr.mxu0 0.0
  %541 = vmatpush2.msra.mxu0 0.0
  %542 = vmatprep.subr.mxu0 0.0
  %543 = vmatpush2.msra.mxu0 0.0
  %544 = vmatprep.subr.mxu0 0.0
  %545 = vmatpush2.msra.mxu0 0.0
  %546 = vmatprep.subr.mxu0 0.0
  %547 = vmatpush2.msra.mxu0 0.0
  %548 = vmatprep.subr.mxu0 0.0
  %549 = vmatpush2.msra.mxu0 0.0
  %550 = vmatprep.subr.mxu0 0.0
  %551 = vmatpush2.msra.mxu0 0.0
  %552 = vmatprep.subr.mxu0 0.0
  %553 = vmatpush2.msra.mxu0 0.0
  %554 = vmatprep.subr.mxu0 0.0
  %555 = vmatpush2.msra.mxu0 0.0
  %556 = vmatprep.subr.mxu0 0.0
  %557 = vmatpush2.msra.mxu0 0.0
  %558 = vmatprep.subr.mxu0 0.0
  %559 = vmatpush2.msra.mxu0 0.0
  %560 = vmatprep.subr.mxu0 0.0
  %561 = vmatpush2.msra.mxu0 0.0
  %562 = vmatprep.subr.mxu0 0.0
  %563 = vmatpush2.msra.mxu0 0.0
  %564 = vmatprep.subr.mxu0 0.0
  %565 = vmatpush2.msra.mxu0 0.0
  %566 = vmatprep.subr.mxu0 0.0
  %567 = vmatpush2.msra.mxu0 0.0
  %568 = vmatprep.mubr.f32.mxu0 0.0
  %569 = vmatmul.mubr.f32.gmra.mxu0 %v431
  %v570 = vpop.f32.mrf.mxu0
  %v571 = vadd.f32 0.0, %v570
  %v572 = vpop.f32.mrf.mxu0
  %573 = vdwg.mxu0
  %574 = vmatprep.subr.mxu0 0.0
  %575 = vmatpush1.msra.mxu0 %v273
  %576 = vmatprep.subr.mxu0 0.0
  %577 = vmatpush1.msra.mxu0 %v272
  %578 = vmatprep.subr.mxu0 0.0
  %579 = vmatpush1.msra.mxu0 %v271
  %580 = vmatprep.subr.mxu0 0.0
  %581 = vmatpush1.msra.mxu0 %v270
  %582 = vmatprep.subr.mxu0 0.0
  %583 = vmatpush1.msra.mxu0 %v269
  %584 = vmatprep.subr.mxu0 0.0
  %585 = vmatpush1.msra.mxu0 %v268
  %586 = vmatprep.subr.mxu0 0.0
  %587 = vmatpush1.msra.mxu0 %v267
  %588 = vmatprep.subr.mxu0 0.0
  %589 = vmatpush1.msra.mxu0 %v266
  %590 = vmatprep.subr.mxu0 0.0
  %591 = vmatpush1.msra.mxu0 %v265
  %592 = vmatprep.subr.mxu0 0.0
  %593 = vmatpush1.msra.mxu0 %v264
  %594 = vmatprep.subr.mxu0 0.0
  %595 = vmatpush1.msra.mxu0 %v263
  %596 = vmatprep.subr.mxu0 0.0
  %597 = vmatpush1.msra.mxu0 %v262
  %598 = vmatprep.subr.mxu0 0.0
  %599 = vmatpush1.msra.mxu0 %v261
  %600 = vmatprep.subr.mxu0 0.0
  %601 = vmatpush1.msra.mxu0 %v260
  %602 = vmatprep.subr.mxu0 0.0
  %603 = vmatpush1.msra.mxu0 %v259
  %604 = vmatprep.subr.mxu0 0.0
  %605 = vmatpush1.msra.mxu0 %v258
  %606 = vmatprep.subr.mxu0 0.0
  %607 = vmatpush2.msra.mxu0 0.0
  %608 = vmatprep.subr.mxu0 0.0
  %609 = vmatpush2.msra.mxu0 0.0
  %610 = vmatprep.subr.mxu0 0.0
  %611 = vmatpush2.msra.mxu0 0.0
  %612 = vmatprep.subr.mxu0 0.0
  %613 = vmatpush2.msra.mxu0 0.0
  %614 = vmatprep.subr.mxu0 0.0
  %615 = vmatpush2.msra.mxu0 0.0
  %616 = vmatprep.subr.mxu0 0.0
  %617 = vmatpush2.msra.mxu0 0.0
  %618 = vmatprep.subr.mxu0 0.0
  %619 = vmatpush2.msra.mxu0 0.0
  %620 = vmatprep.subr.mxu0 0.0
  %621 = vmatpush2.msra.mxu0 0.0
  %622 = vmatprep.subr.mxu0 0.0
  %623 = vmatpush2.msra.mxu0 0.0
  %624 = vmatprep.subr.mxu0 0.0
  %625 = vmatpush2.msra.mxu0 0.0
  %626 = vmatprep.subr.mxu0 0.0
  %627 = vmatpush2.msra.mxu0 0.0
  %628 = vmatprep.subr.mxu0 0.0
  %629 = vmatpush2.msra.mxu0 0.0
  %630 = vmatprep.subr.mxu0 0.0
  %631 = vmatpush2.msra.mxu0 0.0
  %632 = vmatprep.subr.mxu0 0.0
  %633 = vmatpush2.msra.mxu0 0.0
  %634 = vmatprep.subr.mxu0 0.0
  %635 = vmatpush2.msra.mxu0 0.0
  %636 = vmatprep.subr.mxu0 0.0
  %637 = vmatpush2.msra.mxu0 0.0
  %638 = vmatprep.mubr.f32.mxu0 0.0
  %639 = vmatmul.mubr.f32.gmra.mxu0 %v257
  %v640 = vpop.f32.mrf.mxu0
  %v641 = vadd.f32 %v571, %v640
  %v642 = vpop.f32.mrf.mxu0
  %643 = vdwg.mxu0
  %v644 = vadd.f32 %v641, %v168
  %v645 = vtanh.pop %v644
  %646 = vmatprep.subr.mxu0 0.0
  %647 = vmatpush1.msra.mxu0 %v185
  %648 = vmatprep.subr.mxu0 0.0
  %649 = vmatpush1.msra.mxu0 %v184
  %650 = vmatprep.subr.mxu0 0.0
  %651 = vmatpush1.msra.mxu0 %v183
  %652 = vmatprep.subr.mxu0 0.0
  %653 = vmatpush1.msra.mxu0 %v182
  %654 = vmatprep.subr.mxu0 0.0
  %655 = vmatpush1.msra.mxu0 %v181
  %656 = vmatprep.subr.mxu0 0.0
  %657 = vmatpush1.msra.mxu0 %v180
  %658 = vmatprep.subr.mxu0 0.0
  %659 = vmatpush1.msra.mxu0 %v179
  %660 = vmatprep.subr.mxu0 0.0
  %661 = vmatpush1.msra.mxu0 %v178
  %662 = vmatprep.subr.mxu0 0.0
  %663 = vmatpush1.msra.mxu0 %v177
  %664 = vmatprep.subr.mxu0 0.0
  %665 = vmatpush1.msra.mxu0 %v176
  %666 = vmatprep.subr.mxu0 0.0
  %667 = vmatpush1.msra.mxu0 %v175
  %668 = vmatprep.subr.mxu0 0.0
  %669 = vmatpush1.msra.mxu0 %v174
  %670 = vmatprep.subr.mxu0 0.0
  %671 = vmatpush1.msra.mxu0 %v173
  %672 = vmatprep.subr.mxu0 0.0
  %673 = vmatpush1.msra.mxu0 %v172
  %674 = vmatprep.subr.mxu0 0.0
  %675 = vmatpush1.msra.mxu0 %v171
  %676 = vmatprep.subr.mxu0 0.0
  %677 = vmatpush1.msra.mxu0 %v170
  %678 = vmatprep.subr.mxu0 0.0
  %679 = vmatpush2.msra.mxu0 0.0
  %680 = vmatprep.subr.mxu0 0.0
  %681 = vmatpush2.msra.mxu0 0.0
  %682 = vmatprep.subr.mxu0 0.0
  %683 = vmatpush2.msra.mxu0 0.0
  %684 = vmatprep.subr.mxu0 0.0
  %685 = vmatpush2.msra.mxu0 0.0
  %686 = vmatprep.subr.mxu0 0.0
  %687 = vmatpush2.msra.mxu0 0.0
  %688 = vmatprep.subr.mxu0 0.0
  %689 = vmatpush2.msra.mxu0 0.0
  %690 = vmatprep.subr.mxu0 0.0
  %691 = vmatpush2.msra.mxu0 0.0
  %692 = vmatprep.subr.mxu0 0.0
  %693 = vmatpush2.msra.mxu0 0.0
  %694 = vmatprep.subr.mxu0 0.0
  %695 = vmatpush2.msra.mxu0 0.0
  %696 = vmatprep.subr.mxu0 0.0
  %697 = vmatpush2.msra.mxu0 0.0
  %698 = vmatprep.subr.mxu0 0.0
  %699 = vmatpush2.msra.mxu0 0.0
  %700 = vmatprep.subr.mxu0 0.0
  %701 = vmatpush2.msra.mxu0 0.0
  %702 = vmatprep.subr.mxu0 0.0
  %703 = vmatpush2.msra.mxu0 0.0
  %704 = vmatprep.subr.mxu0 0.0
  %705 = vmatpush2.msra.mxu0 0.0
  %706 = vmatprep.subr.mxu0 0.0
  %707 = vmatpush2.msra.mxu0 0.0
  %708 = vmatprep.subr.mxu0 0.0
  %709 = vmatpush2.msra.mxu0 0.0
  %710 = vmatprep.mubr.f32.mxu0 0.0
  %711 = vmatmul.mubr.f32.gmra.mxu0 %v503
  %v712 = vpop.f32.mrf.mxu0
  %v713 = vadd.f32 0.0, %v712
  %v714 = vpop.f32.mrf.mxu0
  %715 = vdwg.mxu0
  %v716 = vadd.f32 %v145, %v713
  %v717 = vtanh.pop %v716
  %718 = vmatprep.subr.mxu0 0.0
  %719 = vmatpush1.msra.mxu0 %v289
  %720 = vmatprep.subr.mxu0 0.0
  %721 = vmatpush1.msra.mxu0 %v288
  %722 = vmatprep.subr.mxu0 0.0
  %723 = vmatpush1.msra.mxu0 %v287
  %724 = vmatprep.subr.mxu0 0.0
  %725 = vmatpush1.msra.mxu0 %v286
  %726 = vmatprep.subr.mxu0 0.0
  %727 = vmatpush1.msra.mxu0 %v285
  %728 = vmatprep.subr.mxu0 0.0
  %729 = vmatpush1.msra.mxu0 %v284
  %730 = vmatprep.subr.mxu0 0.0
  %731 = vmatpush1.msra.mxu0 %v283
  %732 = vmatprep.subr.mxu0 0.0
  %733 = vmatpush1.msra.mxu0 %v282
  %734 = vmatprep.subr.mxu0 0.0
  %735 = vmatpush1.msra.mxu0 %v281
  %736 = vmatprep.subr.mxu0 0.0
  %737 = vmatpush1.msra.mxu0 %v280
  %738 = vmatprep.subr.mxu0 0.0
  %739 = vmatpush1.msra.mxu0 %v279
  %740 = vmatprep.subr.mxu0 0.0
  %741 = vmatpush1.msra.mxu0 %v278
  %742 = vmatprep.subr.mxu0 0.0
  %743 = vmatpush1.msra.mxu0 %v277
  %744 = vmatprep.subr.mxu0 0.0
  %745 = vmatpush1.msra.mxu0 %v276
  %746 = vmatprep.subr.mxu0 0.0
  %747 = vmatpush1.msra.mxu0 %v275
  %748 = vmatprep.subr.mxu0 0.0
  %749 = vmatpush1.msra.mxu0 %v274
  %750 = vmatprep.subr.mxu0 0.0
  %751 = vmatpush2.msra.mxu0 0.0
  %752 = vmatprep.subr.mxu0 0.0
  %753 = vmatpush2.msra.mxu0 0.0
  %754 = vmatprep.subr.mxu0 0.0
  %755 = vmatpush2.msra.mxu0 0.0
  %756 = vmatprep.subr.mxu0 0.0
  %757 = vmatpush2.msra.mxu0 0.0
  %758 = vmatprep.subr.mxu0 0.0
  %759 = vmatpush2.msra.mxu0 0.0
  %760 = vmatprep.subr.mxu0 0.0
  %761 = vmatpush2.msra.mxu0 0.0
  %762 = vmatprep.subr.mxu0 0.0
  %763 = vmatpush2.msra.mxu0 0.0
  %764 = vmatprep.subr.mxu0 0.0
  %765 = vmatpush2.msra.mxu0 0.0
  %766 = vmatprep.subr.mxu0 0.0
  %767 = vmatpush2.msra.mxu0 0.0
  %768 = vmatprep.subr.mxu0 0.0
  %769 = vmatpush2.msra.mxu0 0.0
  %770 = vmatprep.subr.mxu0 0.0
  %771 = vmatpush2.msra.mxu0 0.0
  %772 = vmatprep.subr.mxu0 0.0
  %773 = vmatpush2.msra.mxu0 0.0
  %774 = vmatprep.subr.mxu0 0.0
  %775 = vmatpush2.msra.mxu0 0.0
  %776 = vmatprep.subr.mxu0 0.0
  %777 = vmatpush2.msra.mxu0 0.0
  %778 = vmatprep.subr.mxu0 0.0
  %779 = vmatpush2.msra.mxu0 0.0
  %780 = vmatprep.subr.mxu0 0.0
  %781 = vmatpush2.msra.mxu0 0.0
  %782 = vmatprep.mubr.f32.mxu0 0.0
  %783 = vmatmul.mubr.f32.gmra.mxu0 %v645
  %v784 = vpop.f32.mrf.mxu0
  %v785 = vadd.f32 0.0, %v784
  %v786 = vpop.f32.mrf.mxu0
  %787 = vdwg.mxu0
  %788 = vmatprep.subr.mxu0 0.0
  %789 = vmatpush1.msra.mxu0 %v273
  %790 = vmatprep.subr.mxu0 0.0
  %791 = vmatpush1.msra.mxu0 %v272
  %792 = vmatprep.subr.mxu0 0.0
  %793 = vmatpush1.msra.mxu0 %v271
  %794 = vmatprep.subr.mxu0 0.0
  %795 = vmatpush1.msra.mxu0 %v270
  %796 = vmatprep.subr.mxu0 0.0
  %797 = vmatpush1.msra.mxu0 %v269
  %798 = vmatprep.subr.mxu0 0.0
  %799 = vmatpush1.msra.mxu0 %v268
  %800 = vmatprep.subr.mxu0 0.0
  %801 = vmatpush1.msra.mxu0 %v267
  %802 = vmatprep.subr.mxu0 0.0
  %803 = vmatpush1.msra.mxu0 %v266
  %804 = vmatprep.subr.mxu0 0.0
  %805 = vmatpush1.msra.mxu0 %v265
  %806 = vmatprep.subr.mxu0 0.0
  %807 = vmatpush1.msra.mxu0 %v264
  %808 = vmatprep.subr.mxu0 0.0
  %809 = vmatpush1.msra.mxu0 %v263
  %810 = vmatprep.subr.mxu0 0.0
  %811 = vmatpush1.msra.mxu0 %v262
  %812 = vmatprep.subr.mxu0 0.0
  %813 = vmatpush1.msra.mxu0 %v261
  %814 = vmatprep.subr.mxu0 0.0
  %815 = vmatpush1.msra.mxu0 %v260
  %816 = vmatprep.subr.mxu0 0.0
  %817 = vmatpush1.msra.mxu0 %v259
  %818 = vmatprep.subr.mxu0 0.0
  %819 = vmatpush1.msra.mxu0 %v258
  %820 = vmatprep.subr.mxu0 0.0
  %821 = vmatpush2.msra.mxu0 0.0
  %822 = vmatprep.subr.mxu0 0.0
  %823 = vmatpush2.msra.mxu0 0.0
  %824 = vmatprep.subr.mxu0 0.0
  %825 = vmatpush2.msra.mxu0 0.0
  %826 = vmatprep.subr.mxu0 0.0
  %827 = vmatpush2.msra.mxu0 0.0
  %828 = vmatprep.subr.mxu0 0.0
  %829 = vmatpush2.msra.mxu0 0.0
  %830 = vmatprep.subr.mxu0 0.0
  %831 = vmatpush2.msra.mxu0 0.0
  %832 = vmatprep.subr.mxu0 0.0
  %833 = vmatpush2.msra.mxu0 0.0
  %834 = vmatprep.subr.mxu0 0.0
  %835 = vmatpush2.msra.mxu0 0.0
  %836 = vmatprep.subr.mxu0 0.0
  %837 = vmatpush2.msra.mxu0 0.0
  %838 = vmatprep.subr.mxu0 0.0
  %839 = vmatpush2.msra.mxu0 0.0
  %840 = vmatprep.subr.mxu0 0.0
  %841 = vmatpush2.msra.mxu0 0.0
  %842 = vmatprep.subr.mxu0 0.0
  %843 = vmatpush2.msra.mxu0 0.0
  %844 = vmatprep.subr.mxu0 0.0
  %845 = vmatpush2.msra.mxu0 0.0
  %846 = vmatprep.subr.mxu0 0.0
  %847 = vmatpush2.msra.mxu0 0.0
  %848 = vmatprep.subr.mxu0 0.0
  %849 = vmatpush2.msra.mxu0 0.0
  %850 = vmatprep.subr.mxu0 0.0
  %851 = vmatpush2.msra.mxu0 0.0
  %852 = vmatprep.mubr.f32.mxu0 0.0
  %853 = vmatmul.mubr.f32.gmra.mxu0 %v503
  %v854 = vpop.f32.mrf.mxu0
  %v855 = vadd.f32 %v785, %v854
  %v856 = vpop.f32.mrf.mxu0
  %857 = vdwg.mxu0
  %v858 = vadd.f32 %v855, %v168
  %v859 = vtanh.pop %v858
  %860 = vmatprep.subr.mxu0 0.0
  %861 = vmatpush1.msra.mxu0 %v185
  %862 = vmatprep.subr.mxu0 0.0
  %863 = vmatpush1.msra.mxu0 %v184
  %864 = vmatprep.subr.mxu0 0.0
  %865 = vmatpush1.msra.mxu0 %v183
  %866 = vmatprep.subr.mxu0 0.0
  %867 = vmatpush1.msra.mxu0 %v182
  %868 = vmatprep.subr.mxu0 0.0
  %869 = vmatpush1.msra.mxu0 %v181
  %870 = vmatprep.subr.mxu0 0.0
  %871 = vmatpush1.msra.mxu0 %v180
  %872 = vmatprep.subr.mxu0 0.0
  %873 = vmatpush1.msra.mxu0 %v179
  %874 = vmatprep.subr.mxu0 0.0
  %875 = vmatpush1.msra.mxu0 %v178
  %876 = vmatprep.subr.mxu0 0.0
  %877 = vmatpush1.msra.mxu0 %v177
  %878 = vmatprep.subr.mxu0 0.0
  %879 = vmatpush1.msra.mxu0 %v176
  %880 = vmatprep.subr.mxu0 0.0
  %881 = vmatpush1.msra.mxu0 %v175
  %882 = vmatprep.subr.mxu0 0.0
  %883 = vmatpush1.msra.mxu0 %v174
  %884 = vmatprep.subr.mxu0 0.0
  %885 = vmatpush1.msra.mxu0 %v173
  %886 = vmatprep.subr.mxu0 0.0
  %887 = vmatpush1.msra.mxu0 %v172
  %888 = vmatprep.subr.mxu0 0.0
  %889 = vmatpush1.msra.mxu0 %v171
  %890 = vmatprep.subr.mxu0 0.0
  %891 = vmatpush1.msra.mxu0 %v170
  %892 = vmatprep.subr.mxu0 0.0
  %893 = vmatpush2.msra.mxu0 0.0
  %894 = vmatprep.subr.mxu0 0.0
  %895 = vmatpush2.msra.mxu0 0.0
  %896 = vmatprep.subr.mxu0 0.0
  %897 = vmatpush2.msra.mxu0 0.0
  %898 = vmatprep.subr.mxu0 0.0
  %899 = vmatpush2.msra.mxu0 0.0
  %900 = vmatprep.subr.mxu0 0.0
  %901 = vmatpush2.msra.mxu0 0.0
  %902 = vmatprep.subr.mxu0 0.0
  %903 = vmatpush2.msra.mxu0 0.0
  %904 = vmatprep.subr.mxu0 0.0
  %905 = vmatpush2.msra.mxu0 0.0
  %906 = vmatprep.subr.mxu0 0.0
  %907 = vmatpush2.msra.mxu0 0.0
  %908 = vmatprep.subr.mxu0 0.0
  %909 = vmatpush2.msra.mxu0 0.0
  %910 = vmatprep.subr.mxu0 0.0
  %911 = vmatpush2.msra.mxu0 0.0
  %912 = vmatprep.subr.mxu0 0.0
  %913 = vmatpush2.msra.mxu0 0.0
  %914 = vmatprep.subr.mxu0 0.0
  %915 = vmatpush2.msra.mxu0 0.0
  %916 = vmatprep.subr.mxu0 0.0
  %917 = vmatpush2.msra.mxu0 0.0
  %918 = vmatprep.subr.mxu0 0.0
  %919 = vmatpush2.msra.mxu0 0.0
  %920 = vmatprep.subr.mxu0 0.0
  %921 = vmatpush2.msra.mxu0 0.0
  %922 = vmatprep.subr.mxu0 0.0
  %923 = vmatpush2.msra.mxu0 0.0
  %924 = vmatprep.mubr.f32.mxu0 0.0
  %925 = vmatmul.mubr.f32.gmra.mxu0 %v717
  %v926 = vpop.f32.mrf.mxu0
  %v927 = vadd.f32 0.0, %v926
  %v928 = vpop.f32.mrf.mxu0
  %929 = vdwg.mxu0
  %v930 = vadd.f32 %v150, %v927
  %v931 = vtanh.pop %v930
  %932 = vmatprep.subr.mxu0 0.0
  %933 = vmatpush1.msra.mxu0 %v289
  %934 = vmatprep.subr.mxu0 0.0
  %935 = vmatpush1.msra.mxu0 %v288
  %936 = vmatprep.subr.mxu0 0.0
  %937 = vmatpush1.msra.mxu0 %v287
  %938 = vmatprep.subr.mxu0 0.0
  %939 = vmatpush1.msra.mxu0 %v286
  %940 = vmatprep.subr.mxu0 0.0
  %941 = vmatpush1.msra.mxu0 %v285
  %942 = vmatprep.subr.mxu0 0.0
  %943 = vmatpush1.msra.mxu0 %v284
  %944 = vmatprep.subr.mxu0 0.0
  %945 = vmatpush1.msra.mxu0 %v283
  %946 = vmatprep.subr.mxu0 0.0
  %947 = vmatpush1.msra.mxu0 %v282
  %948 = vmatprep.subr.mxu0 0.0
  %949 = vmatpush1.msra.mxu0 %v281
  %950 = vmatprep.subr.mxu0 0.0
  %951 = vmatpush1.msra.mxu0 %v280
  %952 = vmatprep.subr.mxu0 0.0
  %953 = vmatpush1.msra.mxu0 %v279
  %954 = vmatprep.subr.mxu0 0.0
  %955 = vmatpush1.msra.mxu0 %v278
  %956 = vmatprep.subr.mxu0 0.0
  %957 = vmatpush1.msra.mxu0 %v277
  %958 = vmatprep.subr.mxu0 0.0
  %959 = vmatpush1.msra.mxu0 %v276
  %960 = vmatprep.subr.mxu0 0.0
  %961 = vmatpush1.msra.mxu0 %v275
  %962 = vmatprep.subr.mxu0 0.0
  %963 = vmatpush1.msra.mxu0 %v274
  %964 = vmatprep.subr.mxu0 0.0
  %965 = vmatpush2.msra.mxu0 0.0
  %966 = vmatprep.subr.mxu0 0.0
  %967 = vmatpush2.msra.mxu0 0.0
  %968 = vmatprep.subr.mxu0 0.0
  %969 = vmatpush2.msra.mxu0 0.0
  %970 = vmatprep.subr.mxu0 0.0
  %971 = vmatpush2.msra.mxu0 0.0
  %972 = vmatprep.subr.mxu0 0.0
  %973 = vmatpush2.msra.mxu0 0.0
  %974 = vmatprep.subr.mxu0 0.0
  %975 = vmatpush2.msra.mxu0 0.0
  %976 = vmatprep.subr.mxu0 0.0
  %977 = vmatpush2.msra.mxu0 0.0
  %978 = vmatprep.subr.mxu0 0.0
  %979 = vmatpush2.msra.mxu0 0.0
  %980 = vmatprep.subr.mxu0 0.0
  %981 = vmatpush2.msra.mxu0 0.0
  %982 = vmatprep.subr.mxu0 0.0
  %983 = vmatpush2.msra.mxu0 0.0
  %984 = vmatprep.subr.mxu0 0.0
  %985 = vmatpush2.msra.mxu0 0.0
  %986 = vmatprep.subr.mxu0 0.0
  %987 = vmatpush2.msra.mxu0 0.0
  %988 = vmatprep.subr.mxu0 0.0
  %989 = vmatpush2.msra.mxu0 0.0
  %990 = vmatprep.subr.mxu0 0.0
  %991 = vmatpush2.msra.mxu0 0.0
  %992 = vmatprep.subr.mxu0 0.0
  %993 = vmatpush2.msra.mxu0 0.0
  %994 = vmatprep.subr.mxu0 0.0
  %995 = vmatpush2.msra.mxu0 0.0
  %996 = vmatprep.mubr.f32.mxu0 0.0
  %997 = vmatmul.mubr.f32.gmra.mxu0 %v859
  %v998 = vpop.f32.mrf.mxu0
  %v999 = vadd.f32 0.0, %v998
  %v1000 = vpop.f32.mrf.mxu0
  %1001 = vdwg.mxu0
  %1002 = vmatprep.subr.mxu0 0.0
  %1003 = vmatpush1.msra.mxu0 %v273
  %1004 = vmatprep.subr.mxu0 0.0
  %1005 = vmatpush1.msra.mxu0 %v272
  %1006 = vmatprep.subr.mxu0 0.0
  %1007 = vmatpush1.msra.mxu0 %v271
  %1008 = vmatprep.subr.mxu0 0.0
  %1009 = vmatpush1.msra.mxu0 %v270
  %1010 = vmatprep.subr.mxu0 0.0
  %1011 = vmatpush1.msra.mxu0 %v269
  %1012 = vmatprep.subr.mxu0 0.0
  %1013 = vmatpush1.msra.mxu0 %v268
  %1014 = vmatprep.subr.mxu0 0.0
  %1015 = vmatpush1.msra.mxu0 %v267
  %1016 = vmatprep.subr.mxu0 0.0
  %1017 = vmatpush1.msra.mxu0 %v266
  %1018 = vmatprep.subr.mxu0 0.0
  %1019 = vmatpush1.msra.mxu0 %v265
  %1020 = vmatprep.subr.mxu0 0.0
  %1021 = vmatpush1.msra.mxu0 %v264
  %1022 = vmatprep.subr.mxu0 0.0
  %1023 = vmatpush1.msra.mxu0 %v263
  %1024 = vmatprep.subr.mxu0 0.0
  %1025 = vmatpush1.msra.mxu0 %v262
  %1026 = vmatprep.subr.mxu0 0.0
  %1027 = vmatpush1.msra.mxu0 %v261
  %1028 = vmatprep.subr.mxu0 0.0
  %1029 = vmatpush1.msra.mxu0 %v260
  %1030 = vmatprep.subr.mxu0 0.0
  %1031 = vmatpush1.msra.mxu0 %v259
  %1032 = vmatprep.subr.mxu0 0.0
  %1033 = vmatpush1.msra.mxu0 %v258
  %1034 = vmatprep.subr.mxu0 0.0
  %1035 = vmatpush2.msra.mxu0 0.0
  %1036 = vmatprep.subr.mxu0 0.0
  %1037 = vmatpush2.msra.mxu0 0.0
  %1038 = vmatprep.subr.mxu0 0.0
  %1039 = vmatpush2.msra.mxu0 0.0
  %1040 = vmatprep.subr.mxu0 0.0
  %1041 = vmatpush2.msra.mxu0 0.0
  %1042 = vmatprep.subr.mxu0 0.0
  %1043 = vmatpush2.msra.mxu0 0.0
  %1044 = vmatprep.subr.mxu0 0.0
  %1045 = vmatpush2.msra.mxu0 0.0
  %1046 = vmatprep.subr.mxu0 0.0
  %1047 = vmatpush2.msra.mxu0 0.0
  %1048 = vmatprep.subr.mxu0 0.0
  %1049 = vmatpush2.msra.mxu0 0.0
  %1050 = vmatprep.subr.mxu0 0.0
  %1051 = vmatpush2.msra.mxu0 0.0
  %1052 = vmatprep.subr.mxu0 0.0
  %1053 = vmatpush2.msra.mxu0 0.0
  %1054 = vmatprep.subr.mxu0 0.0
  %1055 = vmatpush2.msra.mxu0 0.0
  %1056 = vmatprep.subr.mxu0 0.0
  %1057 = vmatpush2.msra.mxu0 0.0
  %1058 = vmatprep.subr.mxu0 0.0
  %1059 = vmatpush2.msra.mxu0 0.0
  %1060 = vmatprep.subr.mxu0 0.0
  %1061 = vmatpush2.msra.mxu0 0.0
  %1062 = vmatprep.subr.mxu0 0.0
  %1063 = vmatpush2.msra.mxu0 0.0
  %1064 = vmatprep.subr.mxu0 0.0
  %1065 = vmatpush2.msra.mxu0 0.0
  %1066 = vmatprep.mubr.f32.mxu0 0.0
  %1067 = vmatmul.mubr.f32.gmra.mxu0 %v717
  %v1068 = vpop.f32.mrf.mxu0
  %v1069 = vadd.f32 %v999, %v1068
  %v1070 = vpop.f32.mrf.mxu0
  %1071 = vdwg.mxu0
  %v1072 = vadd.f32 %v1069, %v168
  %v1073 = vtanh.pop %v1072
  %1074 = vmatprep.subr.mxu0 0.0
  %1075 = vmatpush1.msra.mxu0 %v185
  %1076 = vmatprep.subr.mxu0 0.0
  %1077 = vmatpush1.msra.mxu0 %v184
  %1078 = vmatprep.subr.mxu0 0.0
  %1079 = vmatpush1.msra.mxu0 %v183
  %1080 = vmatprep.subr.mxu0 0.0
  %1081 = vmatpush1.msra.mxu0 %v182
  %1082 = vmatprep.subr.mxu0 0.0
  %1083 = vmatpush1.msra.mxu0 %v181
  %1084 = vmatprep.subr.mxu0 0.0
  %1085 = vmatpush1.msra.mxu0 %v180
  %1086 = vmatprep.subr.mxu0 0.0
  %1087 = vmatpush1.msra.mxu0 %v179
  %1088 = vmatprep.subr.mxu0 0.0
  %1089 = vmatpush1.msra.mxu0 %v178
  %1090 = vmatprep.subr.mxu0 0.0
  %1091 = vmatpush1.msra.mxu0 %v177
  %1092 = vmatprep.subr.mxu0 0.0
  %1093 = vmatpush1.msra.mxu0 %v176
  %1094 = vmatprep.subr.mxu0 0.0
  %1095 = vmatpush1.msra.mxu0 %v175
  %1096 = vmatprep.subr.mxu0 0.0
  %1097 = vmatpush1.msra.mxu0 %v174
  %1098 = vmatprep.subr.mxu0 0.0
  %1099 = vmatpush1.msra.mxu0 %v173
  %1100 = vmatprep.subr.mxu0 0.0
  %1101 = vmatpush1.msra.mxu0 %v172
  %1102 = vmatprep.subr.mxu0 0.0
  %1103 = vmatpush1.msra.mxu0 %v171
  %1104 = vmatprep.subr.mxu0 0.0
  %1105 = vmatpush1.msra.mxu0 %v170
  %1106 = vmatprep.subr.mxu0 0.0
  %1107 = vmatpush2.msra.mxu0 0.0
  %1108 = vmatprep.subr.mxu0 0.0
  %1109 = vmatpush2.msra.mxu0 0.0
  %1110 = vmatprep.subr.mxu0 0.0
  %1111 = vmatpush2.msra.mxu0 0.0
  %1112 = vmatprep.subr.mxu0 0.0
  %1113 = vmatpush2.msra.mxu0 0.0
  %1114 = vmatprep.subr.mxu0 0.0
  %1115 = vmatpush2.msra.mxu0 0.0
  %1116 = vmatprep.subr.mxu0 0.0
  %1117 = vmatpush2.msra.mxu0 0.0
  %1118 = vmatprep.subr.mxu0 0.0
  %1119 = vmatpush2.msra.mxu0 0.0
  %1120 = vmatprep.subr.mxu0 0.0
  %1121 = vmatpush2.msra.mxu0 0.0
  %1122 = vmatprep.subr.mxu0 0.0
  %1123 = vmatpush2.msra.mxu0 0.0
  %1124 = vmatprep.subr.mxu0 0.0
  %1125 = vmatpush2.msra.mxu0 0.0
  %1126 = vmatprep.subr.mxu0 0.0
  %1127 = vmatpush2.msra.mxu0 0.0
  %1128 = vmatprep.subr.mxu0 0.0
  %1129 = vmatpush2.msra.mxu0 0.0
  %1130 = vmatprep.subr.mxu0 0.0
  %1131 = vmatpush2.msra.mxu0 0.0
  %1132 = vmatprep.subr.mxu0 0.0
  %1133 = vmatpush2.msra.mxu0 0.0
  %1134 = vmatprep.subr.mxu0 0.0
  %1135 = vmatpush2.msra.mxu0 0.0
  %1136 = vmatprep.subr.mxu0 0.0
  %1137 = vmatpush2.msra.mxu0 0.0
  %1138 = vmatprep.mubr.f32.mxu0 0.0
  %1139 = vmatmul.mubr.f32.gmra.mxu0 %v931
  %v1140 = vpop.f32.mrf.mxu0
  %v1141 = vadd.f32 0.0, %v1140
  %v1142 = vpop.f32.mrf.mxu0
  %1143 = vdwg.mxu0
  %v1144 = vadd.f32 %v155, %v1141
  %v1145 = vtanh.pop %v1144
  %1146 = vmatprep.subr.mxu0 0.0
  %1147 = vmatpush1.msra.mxu0 %v289
  %1148 = vmatprep.subr.mxu0 0.0
  %1149 = vmatpush1.msra.mxu0 %v288
  %1150 = vmatprep.subr.mxu0 0.0
  %1151 = vmatpush1.msra.mxu0 %v287
  %1152 = vmatprep.subr.mxu0 0.0
  %1153 = vmatpush1.msra.mxu0 %v286
  %1154 = vmatprep.subr.mxu0 0.0
  %1155 = vmatpush1.msra.mxu0 %v285
  %1156 = vmatprep.subr.mxu0 0.0
  %1157 = vmatpush1.msra.mxu0 %v284
  %1158 = vmatprep.subr.mxu0 0.0
  %1159 = vmatpush1.msra.mxu0 %v283
  %1160 = vmatprep.subr.mxu0 0.0
  %1161 = vmatpush1.msra.mxu0 %v282
  %1162 = vmatprep.subr.mxu0 0.0
  %1163 = vmatpush1.msra.mxu0 %v281
  %1164 = vmatprep.subr.mxu0 0.0
  %1165 = vmatpush1.msra.mxu0 %v280
  %1166 = vmatprep.subr.mxu0 0.0
  %1167 = vmatpush1.msra.mxu0 %v279
  %1168 = vmatprep.subr.mxu0 0.0
  %1169 = vmatpush1.msra.mxu0 %v278
  %1170 = vmatprep.subr.mxu0 0.0
  %1171 = vmatpush1.msra.mxu0 %v277
  %1172 = vmatprep.subr.mxu0 0.0
  %1173 = vmatpush1.msra.mxu0 %v276
  %1174 = vmatprep.subr.mxu0 0.0
  %1175 = vmatpush1.msra.mxu0 %v275
  %1176 = vmatprep.subr.mxu0 0.0
  %1177 = vmatpush1.msra.mxu0 %v274
  %1178 = vmatprep.subr.mxu0 0.0
  %1179 = vmatpush2.msra.mxu0 0.0
  %1180 = vmatprep.subr.mxu0 0.0
  %1181 = vmatpush2.msra.mxu0 0.0
  %1182 = vmatprep.subr.mxu0 0.0
  %1183 = vmatpush2.msra.mxu0 0.0
  %1184 = vmatprep.subr.mxu0 0.0
  %1185 = vmatpush2.msra.mxu0 0.0
  %1186 = vmatprep.subr.mxu0 0.0
  %1187 = vmatpush2.msra.mxu0 0.0
  %1188 = vmatprep.subr.mxu0 0.0
  %1189 = vmatpush2.msra.mxu0 0.0
  %1190 = vmatprep.subr.mxu0 0.0
  %1191 = vmatpush2.msra.mxu0 0.0
  %1192 = vmatprep.subr.mxu0 0.0
  %1193 = vmatpush2.msra.mxu0 0.0
  %1194 = vmatprep.subr.mxu0 0.0
  %1195 = vmatpush2.msra.mxu0 0.0
  %1196 = vmatprep.subr.mxu0 0.0
  %1197 = vmatpush2.msra.mxu0 0.0
  %1198 = vmatprep.subr.mxu0 0.0
  %1199 = vmatpush2.msra.mxu0 0.0
  %1200 = vmatprep.subr.mxu0 0.0
  %1201 = vmatpush2.msra.mxu0 0.0
  %1202 = vmatprep.subr.mxu0 0.0
  %1203 = vmatpush2.msra.mxu0 0.0
  %1204 = vmatprep.subr.mxu0 0.0
  %1205 = vmatpush2.msra.mxu0 0.0
  %1206 = vmatprep.subr.mxu0 0.0
  %1207 = vmatpush2.msra.mxu0 0.0
  %1208 = vmatprep.subr.mxu0 0.0
  %1209 = vmatpush2.msra.mxu0 0.0
  %1210 = vmatprep.mubr.f32.mxu0 0.0
  %1211 = vmatmul.mubr.f32.gmra.mxu0 %v1073
  %v1212 = vpop.f32.mrf.mxu0
  %v1213 = vadd.f32 0.0, %v1212
  %v1214 = vpop.f32.mrf.mxu0
  %1215 = vdwg.mxu0
  %1216 = vmatprep.subr.mxu0 0.0
  %1217 = vmatpush1.msra.mxu0 %v273
  %1218 = vmatprep.subr.mxu0 0.0
  %1219 = vmatpush1.msra.mxu0 %v272
  %1220 = vmatprep.subr.mxu0 0.0
  %1221 = vmatpush1.msra.mxu0 %v271
  %1222 = vmatprep.subr.mxu0 0.0
  %1223 = vmatpush1.msra.mxu0 %v270
  %1224 = vmatprep.subr.mxu0 0.0
  %1225 = vmatpush1.msra.mxu0 %v269
  %1226 = vmatprep.subr.mxu0 0.0
  %1227 = vmatpush1.msra.mxu0 %v268
  %1228 = vmatprep.subr.mxu0 0.0
  %1229 = vmatpush1.msra.mxu0 %v267
  %1230 = vmatprep.subr.mxu0 0.0
  %1231 = vmatpush1.msra.mxu0 %v266
  %1232 = vmatprep.subr.mxu0 0.0
  %1233 = vmatpush1.msra.mxu0 %v265
  %1234 = vmatprep.subr.mxu0 0.0
  %1235 = vmatpush1.msra.mxu0 %v264
  %1236 = vmatprep.subr.mxu0 0.0
  %1237 = vmatpush1.msra.mxu0 %v263
  %1238 = vmatprep.subr.mxu0 0.0
  %1239 = vmatpush1.msra.mxu0 %v262
  %1240 = vmatprep.subr.mxu0 0.0
  %1241 = vmatpush1.msra.mxu0 %v261
  %1242 = vmatprep.subr.mxu0 0.0
  %1243 = vmatpush1.msra.mxu0 %v260
  %1244 = vmatprep.subr.mxu0 0.0
  %1245 = vmatpush1.msra.mxu0 %v259
  %1246 = vmatprep.subr.mxu0 0.0
  %1247 = vmatpush1.msra.mxu0 %v258
  %1248 = vmatprep.subr.mxu0 0.0
  %1249 = vmatpush2.msra.mxu0 0.0
  %1250 = vmatprep.subr.mxu0 0.0
  %1251 = vmatpush2.msra.mxu0 0.0
  %1252 = vmatprep.subr.mxu0 0.0
  %1253 = vmatpush2.msra.mxu0 0.0
  %1254 = vmatprep.subr.mxu0 0.0
  %1255 = vmatpush2.msra.mxu0 0.0
  %1256 = vmatprep.subr.mxu0 0.0
  %1257 = vmatpush2.msra.mxu0 0.0
  %1258 = vmatprep.subr.mxu0 0.0
  %1259 = vmatpush2.msra.mxu0 0.0
  %1260 = vmatprep.subr.mxu0 0.0
  %1261 = vmatpush2.msra.mxu0 0.0
  %1262 = vmatprep.subr.mxu0 0.0
  %1263 = vmatpush2.msra.mxu0 0.0
  %1264 = vmatprep.subr.mxu0 0.0
  %1265 = vmatpush2.msra.mxu0 0.0
  %1266 = vmatprep.subr.mxu0 0.0
  %1267 = vmatpush2.msra.mxu0 0.0
  %1268 = vmatprep.subr.mxu0 0.0
  %1269 = vmatpush2.msra.mxu0 0.0
  %1270 = vmatprep.subr.mxu0 0.0
  %1271 = vmatpush2.msra.mxu0 0.0
  %1272 = vmatprep.subr.mxu0 0.0
  %1273 = vmatpush2.msra.mxu0 0.0
  %1274 = vmatprep.subr.mxu0 0.0
  %1275 = vmatpush2.msra.mxu0 0.0
  %1276 = vmatprep.subr.mxu0 0.0
  %1277 = vmatpush2.msra.mxu0 0.0
  %1278 = vmatprep.subr.mxu0 0.0
  %1279 = vmatpush2.msra.mxu0 0.0
  %1280 = vmatprep.mubr.f32.mxu0 0.0
  %1281 = vmatmul.mubr.f32.gmra.mxu0 %v931
  %v1282 = vpop.f32.mrf.mxu0
  %v1283 = vadd.f32 %v1213, %v1282
  %v1284 = vpop.f32.mrf.mxu0
  %1285 = vdwg.mxu0
  %v1286 = vadd.f32 %v1283, %v168
  %v1287 = vtanh.pop %v1286
  %1288 = vmatprep.subr.mxu0 0.0
  %1289 = vmatpush1.msra.mxu0 %v185
  %1290 = vmatprep.subr.mxu0 0.0
  %1291 = vmatpush1.msra.mxu0 %v184
  %1292 = vmatprep.subr.mxu0 0.0
  %1293 = vmatpush1.msra.mxu0 %v183
  %1294 = vmatprep.subr.mxu0 0.0
  %1295 = vmatpush1.msra.mxu0 %v182
  %1296 = vmatprep.subr.mxu0 0.0
  %1297 = vmatpush1.msra.mxu0 %v181
  %1298 = vmatprep.subr.mxu0 0.0
  %1299 = vmatpush1.msra.mxu0 %v180
  %1300 = vmatprep.subr.mxu0 0.0
  %1301 = vmatpush1.msra.mxu0 %v179
  %1302 = vmatprep.subr.mxu0 0.0
  %1303 = vmatpush1.msra.mxu0 %v178
  %1304 = vmatprep.subr.mxu0 0.0
  %1305 = vmatpush1.msra.mxu0 %v177
  %1306 = vmatprep.subr.mxu0 0.0
  %1307 = vmatpush1.msra.mxu0 %v176
  %1308 = vmatprep.subr.mxu0 0.0
  %1309 = vmatpush1.msra.mxu0 %v175
  %1310 = vmatprep.subr.mxu0 0.0
  %1311 = vmatpush1.msra.mxu0 %v174
  %1312 = vmatprep.subr.mxu0 0.0
  %1313 = vmatpush1.msra.mxu0 %v173
  %1314 = vmatprep.subr.mxu0 0.0
  %1315 = vmatpush1.msra.mxu0 %v172
  %1316 = vmatprep.subr.mxu0 0.0
  %1317 = vmatpush1.msra.mxu0 %v171
  %1318 = vmatprep.subr.mxu0 0.0
  %1319 = vmatpush1.msra.mxu0 %v170
  %1320 = vmatprep.subr.mxu0 0.0
  %1321 = vmatpush2.msra.mxu0 0.0
  %1322 = vmatprep.subr.mxu0 0.0
  %1323 = vmatpush2.msra.mxu0 0.0
  %1324 = vmatprep.subr.mxu0 0.0
  %1325 = vmatpush2.msra.mxu0 0.0
  %1326 = vmatprep.subr.mxu0 0.0
  %1327 = vmatpush2.msra.mxu0 0.0
  %1328 = vmatprep.subr.mxu0 0.0
  %1329 = vmatpush2.msra.mxu0 0.0
  %1330 = vmatprep.subr.mxu0 0.0
  %1331 = vmatpush2.msra.mxu0 0.0
  %1332 = vmatprep.subr.mxu0 0.0
  %1333 = vmatpush2.msra.mxu0 0.0
  %1334 = vmatprep.subr.mxu0 0.0
  %1335 = vmatpush2.msra.mxu0 0.0
  %1336 = vmatprep.subr.mxu0 0.0
  %1337 = vmatpush2.msra.mxu0 0.0
  %1338 = vmatprep.subr.mxu0 0.0
  %1339 = vmatpush2.msra.mxu0 0.0
  %1340 = vmatprep.subr.mxu0 0.0
  %1341 = vmatpush2.msra.mxu0 0.0
  %1342 = vmatprep.subr.mxu0 0.0
  %1343 = vmatpush2.msra.mxu0 0.0
  %1344 = vmatprep.subr.mxu0 0.0
  %1345 = vmatpush2.msra.mxu0 0.0
  %1346 = vmatprep.subr.mxu0 0.0
  %1347 = vmatpush2.msra.mxu0 0.0
  %1348 = vmatprep.subr.mxu0 0.0
  %1349 = vmatpush2.msra.mxu0 0.0
  %1350 = vmatprep.subr.mxu0 0.0
  %1351 = vmatpush2.msra.mxu0 0.0
  %1352 = vmatprep.mubr.f32.mxu0 0.0
  %1353 = vmatmul.mubr.f32.gmra.mxu0 %v1145
  %v1354 = vpop.f32.mrf.mxu0
  %v1355 = vadd.f32 0.0, %v1354
  %v1356 = vpop.f32.mrf.mxu0
  %1357 = vdwg.mxu0
  %v1358 = vadd.f32 %v160, %v1355
  %v1359 = vtanh.pop %v1358
  %1360 = vmatprep.subr.mxu0 0.0
  %1361 = vmatpush1.msra.mxu0 %v289
  %1362 = vmatprep.subr.mxu0 0.0
  %1363 = vmatpush1.msra.mxu0 %v288
  %1364 = vmatprep.subr.mxu0 0.0
  %1365 = vmatpush1.msra.mxu0 %v287
  %1366 = vmatprep.subr.mxu0 0.0
  %1367 = vmatpush1.msra.mxu0 %v286
  %1368 = vmatprep.subr.mxu0 0.0
  %1369 = vmatpush1.msra.mxu0 %v285
  %1370 = vmatprep.subr.mxu0 0.0
  %1371 = vmatpush1.msra.mxu0 %v284
  %1372 = vmatprep.subr.mxu0 0.0
  %1373 = vmatpush1.msra.mxu0 %v283
  %1374 = vmatprep.subr.mxu0 0.0
  %1375 = vmatpush1.msra.mxu0 %v282
  %1376 = vmatprep.subr.mxu0 0.0
  %1377 = vmatpush1.msra.mxu0 %v281
  %1378 = vmatprep.subr.mxu0 0.0
  %1379 = vmatpush1.msra.mxu0 %v280
  %1380 = vmatprep.subr.mxu0 0.0
  %1381 = vmatpush1.msra.mxu0 %v279
  %1382 = vmatprep.subr.mxu0 0.0
  %1383 = vmatpush1.msra.mxu0 %v278
  %1384 = vmatprep.subr.mxu0 0.0
  %1385 = vmatpush1.msra.mxu0 %v277
  %1386 = vmatprep.subr.mxu0 0.0
  %1387 = vmatpush1.msra.mxu0 %v276
  %1388 = vmatprep.subr.mxu0 0.0
  %1389 = vmatpush1.msra.mxu0 %v275
  %1390 = vmatprep.subr.mxu0 0.0
  %1391 = vmatpush1.msra.mxu0 %v274
  %1392 = vmatprep.subr.mxu0 0.0
  %1393 = vmatpush2.msra.mxu0 0.0
  %1394 = vmatprep.subr.mxu0 0.0
  %1395 = vmatpush2.msra.mxu0 0.0
  %1396 = vmatprep.subr.mxu0 0.0
  %1397 = vmatpush2.msra.mxu0 0.0
  %1398 = vmatprep.subr.mxu0 0.0
  %1399 = vmatpush2.msra.mxu0 0.0
  %1400 = vmatprep.subr.mxu0 0.0
  %1401 = vmatpush2.msra.mxu0 0.0
  %1402 = vmatprep.subr.mxu0 0.0
  %1403 = vmatpush2.msra.mxu0 0.0
  %1404 = vmatprep.subr.mxu0 0.0
  %1405 = vmatpush2.msra.mxu0 0.0
  %1406 = vmatprep.subr.mxu0 0.0
  %1407 = vmatpush2.msra.mxu0 0.0
  %1408 = vmatprep.subr.mxu0 0.0
  %1409 = vmatpush2.msra.mxu0 0.0
  %1410 = vmatprep.subr.mxu0 0.0
  %1411 = vmatpush2.msra.mxu0 0.0
  %1412 = vmatprep.subr.mxu0 0.0
  %1413 = vmatpush2.msra.mxu0 0.0
  %1414 = vmatprep.subr.mxu0 0.0
  %1415 = vmatpush2.msra.mxu0 0.0
  %1416 = vmatprep.subr.mxu0 0.0
  %1417 = vmatpush2.msra.mxu0 0.0
  %1418 = vmatprep.subr.mxu0 0.0
  %1419 = vmatpush2.msra.mxu0 0.0
  %1420 = vmatprep.subr.mxu0 0.0
  %1421 = vmatpush2.msra.mxu0 0.0
  %1422 = vmatprep.subr.mxu0 0.0
  %1423 = vmatpush2.msra.mxu0 0.0
  %1424 = vmatprep.mubr.f32.mxu0 0.0
  %1425 = vmatmul.mubr.f32.gmra.mxu0 %v1287
  %v1426 = vpop.f32.mrf.mxu0
  %v1427 = vadd.f32 0.0, %v1426
  %v1428 = vpop.f32.mrf.mxu0
  %1429 = vdwg.mxu0
  %1430 = vmatprep.subr.mxu0 0.0
  %1431 = vmatpush1.msra.mxu0 %v273
  %1432 = vmatprep.subr.mxu0 0.0
  %1433 = vmatpush1.msra.mxu0 %v272
  %1434 = vmatprep.subr.mxu0 0.0
  %1435 = vmatpush1.msra.mxu0 %v271
  %1436 = vmatprep.subr.mxu0 0.0
  %1437 = vmatpush1.msra.mxu0 %v270
  %1438 = vmatprep.subr.mxu0 0.0
  %1439 = vmatpush1.msra.mxu0 %v269
  %1440 = vmatprep.subr.mxu0 0.0
  %1441 = vmatpush1.msra.mxu0 %v268
  %1442 = vmatprep.subr.mxu0 0.0
  %1443 = vmatpush1.msra.mxu0 %v267
  %1444 = vmatprep.subr.mxu0 0.0
  %1445 = vmatpush1.msra.mxu0 %v266
  %1446 = vmatprep.subr.mxu0 0.0
  %1447 = vmatpush1.msra.mxu0 %v265
  %1448 = vmatprep.subr.mxu0 0.0
  %1449 = vmatpush1.msra.mxu0 %v264
  %1450 = vmatprep.subr.mxu0 0.0
  %1451 = vmatpush1.msra.mxu0 %v263
  %1452 = vmatprep.subr.mxu0 0.0
  %1453 = vmatpush1.msra.mxu0 %v262
  %1454 = vmatprep.subr.mxu0 0.0
  %1455 = vmatpush1.msra.mxu0 %v261
  %1456 = vmatprep.subr.mxu0 0.0
  %1457 = vmatpush1.msra.mxu0 %v260
  %1458 = vmatprep.subr.mxu0 0.0
  %1459 = vmatpush1.msra.mxu0 %v259
  %1460 = vmatprep.subr.mxu0 0.0
  %1461 = vmatpush1.msra.mxu0 %v258
  %1462 = vmatprep.subr.mxu0 0.0
  %1463 = vmatpush2.msra.mxu0 0.0
  %1464 = vmatprep.subr.mxu0 0.0
  %1465 = vmatpush2.msra.mxu0 0.0
  %1466 = vmatprep.subr.mxu0 0.0
  %1467 = vmatpush2.msra.mxu0 0.0
  %1468 = vmatprep.subr.mxu0 0.0
  %1469 = vmatpush2.msra.mxu0 0.0
  %1470 = vmatprep.subr.mxu0 0.0
  %1471 = vmatpush2.msra.mxu0 0.0
  %1472 = vmatprep.subr.mxu0 0.0
  %1473 = vmatpush2.msra.mxu0 0.0
  %1474 = vmatprep.subr.mxu0 0.0
  %1475 = vmatpush2.msra.mxu0 0.0
  %1476 = vmatprep.subr.mxu0 0.0
  %1477 = vmatpush2.msra.mxu0 0.0
  %1478 = vmatprep.subr.mxu0 0.0
  %1479 = vmatpush2.msra.mxu0 0.0
  %1480 = vmatprep.subr.mxu0 0.0
  %1481 = vmatpush2.msra.mxu0 0.0
  %1482 = vmatprep.subr.mxu0 0.0
  %1483 = vmatpush2.msra.mxu0 0.0
  %1484 = vmatprep.subr.mxu0 0.0
  %1485 = vmatpush2.msra.mxu0 0.0
  %1486 = vmatprep.subr.mxu0 0.0
  %1487 = vmatpush2.msra.mxu0 0.0
  %1488 = vmatprep.subr.mxu0 0.0
  %1489 = vmatpush2.msra.mxu0 0.0
  %1490 = vmatprep.subr.mxu0 0.0
  %1491 = vmatpush2.msra.mxu0 0.0
  %1492 = vmatprep.subr.mxu0 0.0
  %1493 = vmatpush2.msra.mxu0 0.0
  %1494 = vmatprep.mubr.f32.mxu0 0.0
  %1495 = vmatmul.mubr.f32.gmra.mxu0 %v1145
  %v1496 = vpop.f32.mrf.mxu0
  %v1497 = vadd.f32 %v1427, %v1496
  %v1498 = vpop.f32.mrf.mxu0
  %1499 = vdwg.mxu0
  %v1500 = vadd.f32 %v1497, %v168
  %v1501 = vtanh.pop %v1500
  %1502 = vmatprep.subr.mxu0 0.0
  %1503 = vmatpush1.msra.mxu0 %v185
  %1504 = vmatprep.subr.mxu0 0.0
  %1505 = vmatpush1.msra.mxu0 %v184
  %1506 = vmatprep.subr.mxu0 0.0
  %1507 = vmatpush1.msra.mxu0 %v183
  %1508 = vmatprep.subr.mxu0 0.0
  %1509 = vmatpush1.msra.mxu0 %v182
  %1510 = vmatprep.subr.mxu0 0.0
  %1511 = vmatpush1.msra.mxu0 %v181
  %1512 = vmatprep.subr.mxu0 0.0
  %1513 = vmatpush1.msra.mxu0 %v180
  %1514 = vmatprep.subr.mxu0 0.0
  %1515 = vmatpush1.msra.mxu0 %v179
  %1516 = vmatprep.subr.mxu0 0.0
  %1517 = vmatpush1.msra.mxu0 %v178
  %1518 = vmatprep.subr.mxu0 0.0
  %1519 = vmatpush1.msra.mxu0 %v177
  %1520 = vmatprep.subr.mxu0 0.0
  %1521 = vmatpush1.msra.mxu0 %v176
  %1522 = vmatprep.subr.mxu0 0.0
  %1523 = vmatpush1.msra.mxu0 %v175
  %1524 = vmatprep.subr.mxu0 0.0
  %1525 = vmatpush1.msra.mxu0 %v174
  %1526 = vmatprep.subr.mxu0 0.0
  %1527 = vmatpush1.msra.mxu0 %v173
  %1528 = vmatprep.subr.mxu0 0.0
  %1529 = vmatpush1.msra.mxu0 %v172
  %1530 = vmatprep.subr.mxu0 0.0
  %1531 = vmatpush1.msra.mxu0 %v171
  %1532 = vmatprep.subr.mxu0 0.0
  %1533 = vmatpush1.msra.mxu0 %v170
  %1534 = vmatprep.subr.mxu0 0.0
  %1535 = vmatpush2.msra.mxu0 0.0
  %1536 = vmatprep.subr.mxu0 0.0
  %1537 = vmatpush2.msra.mxu0 0.0
  %1538 = vmatprep.subr.mxu0 0.0
  %1539 = vmatpush2.msra.mxu0 0.0
  %1540 = vmatprep.subr.mxu0 0.0
  %1541 = vmatpush2.msra.mxu0 0.0
  %1542 = vmatprep.subr.mxu0 0.0
  %1543 = vmatpush2.msra.mxu0 0.0
  %1544 = vmatprep.subr.mxu0 0.0
  %1545 = vmatpush2.msra.mxu0 0.0
  %1546 = vmatprep.subr.mxu0 0.0
  %1547 = vmatpush2.msra.mxu0 0.0
  %1548 = vmatprep.subr.mxu0 0.0
  %1549 = vmatpush2.msra.mxu0 0.0
  %1550 = vmatprep.subr.mxu0 0.0
  %1551 = vmatpush2.msra.mxu0 0.0
  %1552 = vmatprep.subr.mxu0 0.0
  %1553 = vmatpush2.msra.mxu0 0.0
  %1554 = vmatprep.subr.mxu0 0.0
  %1555 = vmatpush2.msra.mxu0 0.0
  %1556 = vmatprep.subr.mxu0 0.0
  %1557 = vmatpush2.msra.mxu0 0.0
  %1558 = vmatprep.subr.mxu0 0.0
  %1559 = vmatpush2.msra.mxu0 0.0
  %1560 = vmatprep.subr.mxu0 0.0
  %1561 = vmatpush2.msra.mxu0 0.0
  %1562 = vmatprep.subr.mxu0 0.0
  %1563 = vmatpush2.msra.mxu0 0.0
  %1564 = vmatprep.subr.mxu0 0.0
  %1565 = vmatpush2.msra.mxu0 0.0
  %1566 = vmatprep.mubr.f32.mxu0 0.0
  %1567 = vmatmul.mubr.f32.gmra.mxu0 %v1359
  %v1568 = vpop.f32.mrf.mxu0
  %v1569 = vadd.f32 0.0, %v1568
  %v1570 = vpop.f32.mrf.mxu0
  %1571 = vdwg.mxu0
  %v1572 = vadd.f32 %v165, %v1569
  %v1573 = vtanh.pop %v1572
  %1574 = vmatprep.subr.mxu0 0.0
  %1575 = vmatpush1.msra.mxu0 %v289
  %1576 = vmatprep.subr.mxu0 0.0
  %1577 = vmatpush1.msra.mxu0 %v288
  %1578 = vmatprep.subr.mxu0 0.0
  %1579 = vmatpush1.msra.mxu0 %v287
  %1580 = vmatprep.subr.mxu0 0.0
  %1581 = vmatpush1.msra.mxu0 %v286
  %1582 = vmatprep.subr.mxu0 0.0
  %1583 = vmatpush1.msra.mxu0 %v285
  %1584 = vmatprep.subr.mxu0 0.0
  %1585 = vmatpush1.msra.mxu0 %v284
  %1586 = vmatprep.subr.mxu0 0.0
  %1587 = vmatpush1.msra.mxu0 %v283
  %1588 = vmatprep.subr.mxu0 0.0
  %1589 = vmatpush1.msra.mxu0 %v282
  %1590 = vmatprep.subr.mxu0 0.0
  %1591 = vmatpush1.msra.mxu0 %v281
  %1592 = vmatprep.subr.mxu0 0.0
  %1593 = vmatpush1.msra.mxu0 %v280
  %1594 = vmatprep.subr.mxu0 0.0
  %1595 = vmatpush1.msra.mxu0 %v279
  %1596 = vmatprep.subr.mxu0 0.0
  %1597 = vmatpush1.msra.mxu0 %v278
  %1598 = vmatprep.subr.mxu0 0.0
  %1599 = vmatpush1.msra.mxu0 %v277
  %1600 = vmatprep.subr.mxu0 0.0
  %1601 = vmatpush1.msra.mxu0 %v276
  %1602 = vmatprep.subr.mxu0 0.0
  %1603 = vmatpush1.msra.mxu0 %v275
  %1604 = vmatprep.subr.mxu0 0.0
  %1605 = vmatpush1.msra.mxu0 %v274
  %1606 = vmatprep.subr.mxu0 0.0
  %1607 = vmatpush2.msra.mxu0 0.0
  %1608 = vmatprep.subr.mxu0 0.0
  %1609 = vmatpush2.msra.mxu0 0.0
  %1610 = vmatprep.subr.mxu0 0.0
  %1611 = vmatpush2.msra.mxu0 0.0
  %1612 = vmatprep.subr.mxu0 0.0
  %1613 = vmatpush2.msra.mxu0 0.0
  %1614 = vmatprep.subr.mxu0 0.0
  %1615 = vmatpush2.msra.mxu0 0.0
  %1616 = vmatprep.subr.mxu0 0.0
  %1617 = vmatpush2.msra.mxu0 0.0
  %1618 = vmatprep.subr.mxu0 0.0
  %1619 = vmatpush2.msra.mxu0 0.0
  %1620 = vmatprep.subr.mxu0 0.0
  %1621 = vmatpush2.msra.mxu0 0.0
  %1622 = vmatprep.subr.mxu0 0.0
  %1623 = vmatpush2.msra.mxu0 0.0
  %1624 = vmatprep.subr.mxu0 0.0
  %1625 = vmatpush2.msra.mxu0 0.0
  %1626 = vmatprep.subr.mxu0 0.0
  %1627 = vmatpush2.msra.mxu0 0.0
  %1628 = vmatprep.subr.mxu0 0.0
  %1629 = vmatpush2.msra.mxu0 0.0
  %1630 = vmatprep.subr.mxu0 0.0
  %1631 = vmatpush2.msra.mxu0 0.0
  %1632 = vmatprep.subr.mxu0 0.0
  %1633 = vmatpush2.msra.mxu0 0.0
  %1634 = vmatprep.subr.mxu0 0.0
  %1635 = vmatpush2.msra.mxu0 0.0
  %1636 = vmatprep.subr.mxu0 0.0
  %1637 = vmatpush2.msra.mxu0 0.0
  %1638 = vmatprep.mubr.f32.mxu0 0.0
  %1639 = vmatmul.mubr.f32.gmra.mxu0 %v1501
  %v1640 = vpop.f32.mrf.mxu0
  %v1641 = vadd.f32 0.0, %v1640
  %v1642 = vpop.f32.mrf.mxu0
  %1643 = vdwg.mxu0
  %1644 = vmatprep.subr.mxu0 0.0
  %1645 = vmatpush1.msra.mxu0 %v273
  %1646 = vmatprep.subr.mxu0 0.0
  %1647 = vmatpush1.msra.mxu0 %v272
  %1648 = vmatprep.subr.mxu0 0.0
  %1649 = vmatpush1.msra.mxu0 %v271
  %1650 = vmatprep.subr.mxu0 0.0
  %1651 = vmatpush1.msra.mxu0 %v270
  %1652 = vmatprep.subr.mxu0 0.0
  %1653 = vmatpush1.msra.mxu0 %v269
  %1654 = vmatprep.subr.mxu0 0.0
  %1655 = vmatpush1.msra.mxu0 %v268
  %1656 = vmatprep.subr.mxu0 0.0
  %1657 = vmatpush1.msra.mxu0 %v267
  %1658 = vmatprep.subr.mxu0 0.0
  %1659 = vmatpush1.msra.mxu0 %v266
  %1660 = vmatprep.subr.mxu0 0.0
  %1661 = vmatpush1.msra.mxu0 %v265
  %1662 = vmatprep.subr.mxu0 0.0
  %1663 = vmatpush1.msra.mxu0 %v264
  %1664 = vmatprep.subr.mxu0 0.0
  %1665 = vmatpush1.msra.mxu0 %v263
  %1666 = vmatprep.subr.mxu0 0.0
  %1667 = vmatpush1.msra.mxu0 %v262
  %1668 = vmatprep.subr.mxu0 0.0
  %1669 = vmatpush1.msra.mxu0 %v261
  %1670 = vmatprep.subr.mxu0 0.0
  %1671 = vmatpush1.msra.mxu0 %v260
  %1672 = vmatprep.subr.mxu0 0.0
  %1673 = vmatpush1.msra.mxu0 %v259
  %1674 = vmatprep.subr.mxu0 0.0
  %1675 = vmatpush1.msra.mxu0 %v258
  %1676 = vmatprep.subr.mxu0 0.0
  %1677 = vmatpush2.msra.mxu0 0.0
  %1678 = vmatprep.subr.mxu0 0.0
  %1679 = vmatpush2.msra.mxu0 0.0
  %1680 = vmatprep.subr.mxu0 0.0
  %1681 = vmatpush2.msra.mxu0 0.0
  %1682 = vmatprep.subr.mxu0 0.0
  %1683 = vmatpush2.msra.mxu0 0.0
  %1684 = vmatprep.subr.mxu0 0.0
  %1685 = vmatpush2.msra.mxu0 0.0
  %1686 = vmatprep.subr.mxu0 0.0
  %1687 = vmatpush2.msra.mxu0 0.0
  %1688 = vmatprep.subr.mxu0 0.0
  %1689 = vmatpush2.msra.mxu0 0.0
  %1690 = vmatprep.subr.mxu0 0.0
  %1691 = vmatpush2.msra.mxu0 0.0
  %1692 = vmatprep.subr.mxu0 0.0
  %1693 = vmatpush2.msra.mxu0 0.0
  %1694 = vmatprep.subr.mxu0 0.0
  %1695 = vmatpush2.msra.mxu0 0.0
  %1696 = vmatprep.subr.mxu0 0.0
  %1697 = vmatpush2.msra.mxu0 0.0
  %1698 = vmatprep.subr.mxu0 0.0
  %1699 = vmatpush2.msra.mxu0 0.0
  %1700 = vmatprep.subr.mxu0 0.0
  %1701 = vmatpush2.msra.mxu0 0.0
  %1702 = vmatprep.subr.mxu0 0.0
  %1703 = vmatpush2.msra.mxu0 0.0
  %1704 = vmatprep.subr.mxu0 0.0
  %1705 = vmatpush2.msra.mxu0 0.0
  %1706 = vmatprep.subr.mxu0 0.0
  %1707 = vmatpush2.msra.mxu0 0.0
  %1708 = vmatprep.mubr.f32.mxu0 0.0
  %1709 = vmatmul.mubr.f32.gmra.mxu0 %v1359
  %v1710 = vpop.f32.mrf.mxu0
  %v1711 = vadd.f32 %v1641, %v1710
  %v1712 = vpop.f32.mrf.mxu0
  %1713 = vdwg.mxu0
  %v1714 = vadd.f32 %v1711, %v168
  %v1715 = vtanh.pop %v1714
  %1716 = vmatprep.subr.mxu0 0.0
  %1717 = vmatpush1.msra.mxu0 %v289
  %1718 = vmatprep.subr.mxu0 0.0
  %1719 = vmatpush1.msra.mxu0 %v288
  %1720 = vmatprep.subr.mxu0 0.0
  %1721 = vmatpush1.msra.mxu0 %v287
  %1722 = vmatprep.subr.mxu0 0.0
  %1723 = vmatpush1.msra.mxu0 %v286
  %1724 = vmatprep.subr.mxu0 0.0
  %1725 = vmatpush1.msra.mxu0 %v285
  %1726 = vmatprep.subr.mxu0 0.0
  %1727 = vmatpush1.msra.mxu0 %v284
  %1728 = vmatprep.subr.mxu0 0.0
  %1729 = vmatpush1.msra.mxu0 %v283
  %1730 = vmatprep.subr.mxu0 0.0
  %1731 = vmatpush1.msra.mxu0 %v282
  %1732 = vmatprep.subr.mxu0 0.0
  %1733 = vmatpush1.msra.mxu0 %v281
  %1734 = vmatprep.subr.mxu0 0.0
  %1735 = vmatpush1.msra.mxu0 %v280
  %1736 = vmatprep.subr.mxu0 0.0
  %1737 = vmatpush1.msra.mxu0 %v279
  %1738 = vmatprep.subr.mxu0 0.0
  %1739 = vmatpush1.msra.mxu0 %v278
  %1740 = vmatprep.subr.mxu0 0.0
  %1741 = vmatpush1.msra.mxu0 %v277
  %1742 = vmatprep.subr.mxu0 0.0
  %1743 = vmatpush1.msra.mxu0 %v276
  %1744 = vmatprep.subr.mxu0 0.0
  %1745 = vmatpush1.msra.mxu0 %v275
  %1746 = vmatprep.subr.mxu0 0.0
  %1747 = vmatpush1.msra.mxu0 %v274
  %1748 = vmatprep.subr.mxu0 0.0
  %1749 = vmatpush2.msra.mxu0 0.0
  %1750 = vmatprep.subr.mxu0 0.0
  %1751 = vmatpush2.msra.mxu0 0.0
  %1752 = vmatprep.subr.mxu0 0.0
  %1753 = vmatpush2.msra.mxu0 0.0
  %1754 = vmatprep.subr.mxu0 0.0
  %1755 = vmatpush2.msra.mxu0 0.0
  %1756 = vmatprep.subr.mxu0 0.0
  %1757 = vmatpush2.msra.mxu0 0.0
  %1758 = vmatprep.subr.mxu0 0.0
  %1759 = vmatpush2.msra.mxu0 0.0
  %1760 = vmatprep.subr.mxu0 0.0
  %1761 = vmatpush2.msra.mxu0 0.0
  %1762 = vmatprep.subr.mxu0 0.0
  %1763 = vmatpush2.msra.mxu0 0.0
  %1764 = vmatprep.subr.mxu0 0.0
  %1765 = vmatpush2.msra.mxu0 0.0
  %1766 = vmatprep.subr.mxu0 0.0
  %1767 = vmatpush2.msra.mxu0 0.0
  %1768 = vmatprep.subr.mxu0 0.0
  %1769 = vmatpush2.msra.mxu0 0.0
  %1770 = vmatprep.subr.mxu0 0.0
  %1771 = vmatpush2.msra.mxu0 0.0
  %1772 = vmatprep.subr.mxu0 0.0
  %1773 = vmatpush2.msra.mxu0 0.0
  %1774 = vmatprep.subr.mxu0 0.0
  %1775 = vmatpush2.msra.mxu0 0.0
  %1776 = vmatprep.subr.mxu0 0.0
  %1777 = vmatpush2.msra.mxu0 0.0
  %1778 = vmatprep.subr.mxu0 0.0
  %1779 = vmatpush2.msra.mxu0 0.0
  %1780 = vmatprep.mubr.f32.mxu0 0.0
  %1781 = vmatmul.mubr.f32.gmra.mxu0 %v1715
  %v1782 = vpop.f32.mrf.mxu0
  %v1783 = vadd.f32 0.0, %v1782
  %v1784 = vpop.f32.mrf.mxu0
  %1785 = vdwg.mxu0
  %1786 = vmatprep.subr.mxu0 0.0
  %1787 = vmatpush1.msra.mxu0 %v273
  %1788 = vmatprep.subr.mxu0 0.0
  %1789 = vmatpush1.msra.mxu0 %v272
  %1790 = vmatprep.subr.mxu0 0.0
  %1791 = vmatpush1.msra.mxu0 %v271
  %1792 = vmatprep.subr.mxu0 0.0
  %1793 = vmatpush1.msra.mxu0 %v270
  %1794 = vmatprep.subr.mxu0 0.0
  %1795 = vmatpush1.msra.mxu0 %v269
  %1796 = vmatprep.subr.mxu0 0.0
  %1797 = vmatpush1.msra.mxu0 %v268
  %1798 = vmatprep.subr.mxu0 0.0
  %1799 = vmatpush1.msra.mxu0 %v267
  %1800 = vmatprep.subr.mxu0 0.0
  %1801 = vmatpush1.msra.mxu0 %v266
  %1802 = vmatprep.subr.mxu0 0.0
  %1803 = vmatpush1.msra.mxu0 %v265
  %1804 = vmatprep.subr.mxu0 0.0
  %1805 = vmatpush1.msra.mxu0 %v264
  %1806 = vmatprep.subr.mxu0 0.0
  %1807 = vmatpush1.msra.mxu0 %v263
  %1808 = vmatprep.subr.mxu0 0.0
  %1809 = vmatpush1.msra.mxu0 %v262
  %1810 = vmatprep.subr.mxu0 0.0
  %1811 = vmatpush1.msra.mxu0 %v261
  %1812 = vmatprep.subr.mxu0 0.0
  %1813 = vmatpush1.msra.mxu0 %v260
  %1814 = vmatprep.subr.mxu0 0.0
  %1815 = vmatpush1.msra.mxu0 %v259
  %1816 = vmatprep.subr.mxu0 0.0
  %1817 = vmatpush1.msra.mxu0 %v258
  %1818 = vmatprep.subr.mxu0 0.0
  %1819 = vmatpush2.msra.mxu0 0.0
  %1820 = vmatprep.subr.mxu0 0.0
  %1821 = vmatpush2.msra.mxu0 0.0
  %1822 = vmatprep.subr.mxu0 0.0
  %1823 = vmatpush2.msra.mxu0 0.0
  %1824 = vmatprep.subr.mxu0 0.0
  %1825 = vmatpush2.msra.mxu0 0.0
  %1826 = vmatprep.subr.mxu0 0.0
  %1827 = vmatpush2.msra.mxu0 0.0
  %1828 = vmatprep.subr.mxu0 0.0
  %1829 = vmatpush2.msra.mxu0 0.0
  %1830 = vmatprep.subr.mxu0 0.0
  %1831 = vmatpush2.msra.mxu0 0.0
  %1832 = vmatprep.subr.mxu0 0.0
  %1833 = vmatpush2.msra.mxu0 0.0
  %1834 = vmatprep.subr.mxu0 0.0
  %1835 = vmatpush2.msra.mxu0 0.0
  %1836 = vmatprep.subr.mxu0 0.0
  %1837 = vmatpush2.msra.mxu0 0.0
  %1838 = vmatprep.subr.mxu0 0.0
  %1839 = vmatpush2.msra.mxu0 0.0
  %1840 = vmatprep.subr.mxu0 0.0
  %1841 = vmatpush2.msra.mxu0 0.0
  %1842 = vmatprep.subr.mxu0 0.0
  %1843 = vmatpush2.msra.mxu0 0.0
  %1844 = vmatprep.subr.mxu0 0.0
  %1845 = vmatpush2.msra.mxu0 0.0
  %1846 = vmatprep.subr.mxu0 0.0
  %1847 = vmatpush2.msra.mxu0 0.0
  %1848 = vmatprep.subr.mxu0 0.0
  %1849 = vmatpush2.msra.mxu0 0.0
  %1850 = vmatprep.mubr.f32.mxu0 0.0
  %1851 = vmatmul.mubr.f32.gmra.mxu0 %v1573
  %v1852 = vpop.f32.mrf.mxu0
  %v1853 = vadd.f32 %v1783, %v1852
  %v1854 = vpop.f32.mrf.mxu0
  %1855 = vdwg.mxu0
  %v1856 = vadd.f32 %v1853, %v168
  %v1857 = vtanh.pop %v1856
  %v1858 = vld [vmem:[%s7] sm:$0xff]
  %v1859 = vld [vmem:[%s7 + $0x8] sm:$0xff]
  %v1860 = vld [vmem:[%s7 + $0x10] sm:$0xff]
  %v1861 = vld [vmem:[%s7 + $0x18] sm:$0xff]
  %v1862 = vld [vmem:[%s7 + $0x20] sm:$0xff]
  %v1863 = vld [vmem:[%s7 + $0x28] sm:$0xff]
  %v1864 = vld [vmem:[%s7 + $0x30] sm:$0xff]
  %v1865 = vld [vmem:[%s7 + $0x38] sm:$0xff]
  %v1866 = vld [vmem:[%s7 + $0x40] sm:$0xff]
  %v1867 = vld [vmem:[%s7 + $0x48] sm:$0xff]
  %v1868 = vld [vmem:[%s7 + $0x50] sm:$0xff]
  %v1869 = vld [vmem:[%s7 + $0x58] sm:$0xff]
  %v1870 = vld [vmem:[%s7 + $0x60] sm:$0xff]
  %v1871 = vld [vmem:[%s7 + $0x68] sm:$0xff]
  %v1872 = vld [vmem:[%s7 + $0x70] sm:$0xff]
  %v1873 = vld [vmem:[%s7 + $0x78] sm:$0xff]
  %v1874 = vld [vmem:[%s8] sm:$0xff]
  %1875 = vmatprep.subr.mxu0 0.0
  %1876 = vmatpush1.msra.mxu0 %v1873
  %1877 = vmatprep.subr.mxu0 0.0
  %1878 = vmatpush1.msra.mxu0 %v1872
  %1879 = vmatprep.subr.mxu0 0.0
  %1880 = vmatpush1.msra.mxu0 %v1871
  %1881 = vmatprep.subr.mxu0 0.0
  %1882 = vmatpush1.msra.mxu0 %v1870
  %1883 = vmatprep.subr.mxu0 0.0
  %1884 = vmatpush1.msra.mxu0 %v1869
  %1885 = vmatprep.subr.mxu0 0.0
  %1886 = vmatpush1.msra.mxu0 %v1868
  %1887 = vmatprep.subr.mxu0 0.0
  %1888 = vmatpush1.msra.mxu0 %v1867
  %1889 = vmatprep.subr.mxu0 0.0
  %1890 = vmatpush1.msra.mxu0 %v1866
  %1891 = vmatprep.subr.mxu0 0.0
  %1892 = vmatpush1.msra.mxu0 %v1865
  %1893 = vmatprep.subr.mxu0 0.0
  %1894 = vmatpush1.msra.mxu0 %v1864
  %1895 = vmatprep.subr.mxu0 0.0
  %1896 = vmatpush1.msra.mxu0 %v1863
  %1897 = vmatprep.subr.mxu0 0.0
  %1898 = vmatpush1.msra.mxu0 %v1862
  %1899 = vmatprep.subr.mxu0 0.0
  %1900 = vmatpush1.msra.mxu0 %v1861
  %1901 = vmatprep.subr.mxu0 0.0
  %1902 = vmatpush1.msra.mxu0 %v1860
  %1903 = vmatprep.subr.mxu0 0.0
  %1904 = vmatpush1.msra.mxu0 %v1859
  %1905 = vmatprep.subr.mxu0 0.0
  %1906 = vmatpush1.msra.mxu0 %v1858
  %1907 = vmatprep.subr.mxu0 0.0
  %1908 = vmatpush2.msra.mxu0 0.0
  %1909 = vmatprep.subr.mxu0 0.0
  %1910 = vmatpush2.msra.mxu0 0.0
  %1911 = vmatprep.subr.mxu0 0.0
  %1912 = vmatpush2.msra.mxu0 0.0
  %1913 = vmatprep.subr.mxu0 0.0
  %1914 = vmatpush2.msra.mxu0 0.0
  %1915 = vmatprep.subr.mxu0 0.0
  %1916 = vmatpush2.msra.mxu0 0.0
  %1917 = vmatprep.subr.mxu0 0.0
  %1918 = vmatpush2.msra.mxu0 0.0
  %1919 = vmatprep.subr.mxu0 0.0
  %1920 = vmatpush2.msra.mxu0 0.0
  %1921 = vmatprep.subr.mxu0 0.0
  %1922 = vmatpush2.msra.mxu0 0.0
  %1923 = vmatprep.subr.mxu0 0.0
  %1924 = vmatpush2.msra.mxu0 0.0
  %1925 = vmatprep.subr.mxu0 0.0
  %1926 = vmatpush2.msra.mxu0 0.0
  %1927 = vmatprep.subr.mxu0 0.0
  %1928 = vmatpush2.msra.mxu0 0.0
  %1929 = vmatprep.subr.mxu0 0.0
  %1930 = vmatpush2.msra.mxu0 0.0
  %1931 = vmatprep.subr.mxu0 0.0
  %1932 = vmatpush2.msra.mxu0 0.0
  %1933 = vmatprep.subr.mxu0 0.0
  %1934 = vmatpush2.msra.mxu0 0.0
  %1935 = vmatprep.subr.mxu0 0.0
  %1936 = vmatpush2.msra.mxu0 0.0
  %1937 = vmatprep.subr.mxu0 0.0
  %1938 = vmatpush2.msra.mxu0 0.0
  %1939 = vmatprep.mubr.f32.mxu0 0.0
  %1940 = vmatmul.mubr.f32.gmra.mxu0 %v1857
  %v1941 = vpop.f32.mrf.mxu0
  %v1942 = vadd.f32 %v1874, %v1941
  %v1943 = vpop.f32.mrf.mxu0
  %1944 = vdwg.mxu0
  %1945 = vst [vmem:[%s9] sm:$0xff] %v1942
  // Predicated region
  $region38: #{rnn_forward.1} parent=0 // pred_check
    _
  $region39: #{rnn_forward.1} parent=0 // pred_check_branch
    %1947 = sbr.rel (0) target = $region41
  $region40: #{rnn_forward.1} parent=0 // pred_region
    _
  $region41: #{rnn_forward.1} parent=0 // pred_fallthru
    _
  // Predicated region
  $region42: #{rnn_forward.1} parent=0 // pred_check
    _
  $region43: #{rnn_forward.1} parent=0 // pred_check_branch
    %1949 = sbr.rel (0) target = $region45
  $region44: #{rnn_forward.1} parent=0 // pred_region
    _
  $region45: #{rnn_forward.1} parent=0 // pred_fallthru
    _

</llo_original>
